<compile_context>
chip_gen: v7x
topology: tpu7x:2x2x1
jax: 0.10.0
libtpu: 0.0.40
codegen_flags: <defaults>
</compile_context>

<pallas_src>
import functools

import jax
import jax.numpy as jnp
from jax import lax
from jax.experimental import pallas as pl
from jax.experimental.pallas import tpu as pltpu

BN_EPS = 1e-5
LANE = 128

_VMEM_LIMIT_CACHE = None


def _round_up(x, m):
    return ((x + m - 1) // m) * m


def _vmem_limit_bytes():
    """Generation-aware scoped-VMEM limit: ~half of physical VMEM per core."""
    global _VMEM_LIMIT_CACHE
    if _VMEM_LIMIT_CACHE is None:
        cap = 0
        try:
            info = pltpu.get_tpu_info()
            for name in ("vmem_capacity_bytes", "vmem_bytes", "vmem_size_bytes"):
                v = getattr(info, name, None)
                if v:
                    cap = int(v)
                    break
        except Exception:
            cap = 0
        if cap > 0:
            # 64 MiB phys (v7x) -> 32 MiB limit; 128 MiB (v5e/v6e) -> 64 MiB limit
            _VMEM_LIMIT_CACHE = max(32 << 20, min(cap // 2, 100 << 20))
        else:
            _VMEM_LIMIT_CACHE = 32 << 20  # conservative, safe on every generation
    return _VMEM_LIMIT_CACHE


def _mosaic_params():
    return pltpu.CompilerParams(
        dimension_semantics=("parallel",),  # (batch*row-tile) axis -> megacore
        vmem_limit_bytes=_vmem_limit_bytes(),
    )


def _pick_tile(Ho, Wo):
    """Output rows per tile: must divide Ho; target ~512 output pixels per tile."""
    target = max(1, 512 // max(Wo, 1))
    to = 1
    for d in range(1, Ho + 1):
        if Ho % d == 0 and d <= target:
            to = d
    # prefer >=2 row-tiles per image when tall enough (pipelining / megacore)
    if to == Ho and Ho >= 16 and Ho % 2 == 0:
        to = Ho // 2
    return to


# ------------------------------ in-kernel helpers ---------------------------- #

def _bn_affine(st, g, b, inv_m):
    """Training-mode BN affine from [sum, sum_sq] stats (single-pass variance)."""
    mean = st[0:1, :] * inv_m
    var = st[1:2, :] * inv_m - mean * mean
    scale = g * lax.rsqrt(var + BN_EPS)
    shift = b - mean * scale
    return scale, shift


def _taps_matmul(acc_ref, w_ref, tap_fn, TO, Wo):
    """Accumulate the 9 shifted (M,Cin)@(Cin,Cout) MXU matmuls into a VMEM f32 acc."""
    M = TO * Wo
    first = True
    for dy in range(3):
        for dx in range(3):
            tap = tap_fn(dy, dx).reshape(M, -1)  # bf16 (M, Cin)
            d = jnp.dot(tap, w_ref[dy * 3 + dx], preferred_element_type=jnp.float32)
            if first:
                acc_ref[...] = d
                first = False
            else:
                acc_ref[...] += d


def _emit_conv_out(acc_ref, y_ref, ps_ref, TO, Wo):
    """Store bf16 conv output tile + per-tile partial BN stats [sum, sum_sq]."""
    yb = acc_ref[...].astype(jnp.bfloat16)
    y_ref[0] = yb.reshape(TO, Wo, yb.shape[-1])
    yf = yb.astype(jnp.float32)
    ps_ref[0, 0:1, :] = jnp.sum(yf, axis=0, keepdims=True)
    ps_ref[0, 1:2, :] = jnp.sum(yf * yf, axis=0, keepdims=True)


# ---------------------------------- kernels ---------------------------------- #

def _conv1_kernel(*refs, stride, TO, Wo):
    """3x3 / stride-s conv from parity-split, pre-padded bf16 input tiles."""
    s = stride
    ng = s * s
    grp_refs = refs[:ng]
    w_ref = refs[ng]
    y_ref, ps_ref, acc_ref = refs[ng + 1], refs[ng + 2], refs[ng + 3]

    def tap(dy, dx):
        g = grp_refs[(dy % s) * s + (dx % s)]
        r0, c0 = dy // s, dx // s
        return g[0, r0:r0 + TO, c0:c0 + Wo, :]

    _taps_matmul(acc_ref, w_ref, tap, TO, Wo)
    _emit_conv_out(acc_ref, y_ref, ps_ref, TO, Wo)


def _conv2_bn1_kernel(y1_ref, top_ref, bot_ref, st_ref, g_ref, b_ref, w_ref,
                      y2_ref, ps_ref, slab_ref, acc_ref, *, TO, Wo, T, m_total):
    """Fused bn1(batch stats)+ReLU+zero-pad (built in a VMEM slab) + 3x3 conv."""
    t = pl.program_id(0) % T
    scale, shift = _bn_affine(st_ref[...], g_ref[...], b_ref[...], 1.0 / m_total)

    def bn_relu(v):  # (R, Wo, C) bf16 -> bf16
        return jnp.maximum(v.astype(jnp.float32) * scale + shift, 0.0
                           ).astype(jnp.bfloat16)

    interior = bn_relu(y1_ref[0])                    # (TO, Wo, C)
    top = bn_relu(top_ref[0])                        # (1, Wo, C)
    bot = bn_relu(bot_ref[0])
    # halo rows outside the image must stay zero *after* BN+ReLU
    top = jnp.where(t > 0, top, jnp.zeros_like(top))
    bot = jnp.where(t < T - 1, bot, jnp.zeros_like(bot))

    C = interior.shape[-1]
    zcol = jnp.zeros((TO + 2, 1, C), jnp.bfloat16)
    slab_ref[:, 0:1, :] = zcol                       # left pad column
    slab_ref[:, Wo + 1:Wo + 2, :] = zcol             # right pad column
    slab_ref[0:1, 1:1 + Wo, :] = top
    slab_ref[1:1 + TO, 1:1 + Wo, :] = interior
    slab_ref[TO + 1:TO + 2, 1:1 + Wo, :] = bot

    _taps_matmul(acc_ref, w_ref,
                 lambda dy, dx: slab_ref[dy:dy + TO, dx:dx + Wo, :], TO, Wo)
    _emit_conv_out(acc_ref, y2_ref, ps_ref, TO, Wo)


def _bn2_add_relu_kernel(*refs, TO, Wo, m_total, use_conv):
    """bn2 (batch stats) + fused shortcut (1x1 MXU conv or identity) + add + ReLU."""
    if use_conv:
        y_ref, st_ref, g_ref, b_ref, x_ref, w3_ref, b3_ref, o_ref = refs
    else:
        y_ref, st_ref, g_ref, b_ref, x_ref, o_ref = refs
    M = TO * Wo
    C = y_ref.shape[-1]

    scale, shift = _bn_affine(st_ref[...], g_ref[...], b_ref[...], 1.0 / m_total)
    yn = y_ref[0].astype(jnp.float32).reshape(M, C) * scale + shift

    if use_conv:
        res = jnp.dot(x_ref[0].reshape(M, x_ref.shape[-1]), w3_ref[...],
                      preferred_element_type=jnp.float32) + b3_ref[...]
    else:
        res = x_ref[0].reshape(M, C).astype(jnp.float32)

    o_ref[0] = jnp.maximum(yn + res, 0.0).reshape(TO, Wo, C).astype(o_ref.dtype)


# ------------------------------ pallas_call glue ------------------------------ #

def _conv1_call(groups_t, w9, TO, Wo, *, stride):
    NT, Hgt, Wg, Cinp = groups_t[0].shape
    Coutp = w9.shape[-1]
    M = TO * Wo
    grp_spec = pl.BlockSpec((1, Hgt, Wg, Cinp), lambda i: (i, 0, 0, 0))
    kernel = functools.partial(_conv1_kernel, stride=stride, TO=TO, Wo=Wo)
    return pl.pallas_call(
        kernel,
        out_shape=(jax.ShapeDtypeStruct((NT, TO, Wo, Coutp), jnp.bfloat16),
                   jax.ShapeDtypeStruct((NT, 2, Coutp), jnp.float32)),
        grid=(NT,),
        in_specs=[grp_spec] * (stride * stride)
        + [pl.BlockSpec((9, Cinp, Coutp), lambda i: (0, 0, 0))],
        out_specs=(pl.BlockSpec((1, TO, Wo, Coutp), lambda i: (i, 0, 0, 0)),
                   pl.BlockSpec((1, 2, Coutp), lambda i: (i, 0, 0))),
        scratch_shapes=[pltpu.VMEM((M, Coutp), jnp.float32)],
        compiler_params=_mosaic_params(),
    )(*groups_t, w9)


def _conv2_call(y1, top, bot, stats1, gamma, beta, w9, TO, Wo, T, m_total):
    NT = y1.shape[0]
    Coutp = y1.shape[-1]
    M = TO * Wo
    kernel = functools.partial(_conv2_bn1_kernel, TO=TO, Wo=Wo, T=T,
                               m_total=float(m_total))
    return pl.pallas_call(
        kernel,
        out_shape=(jax.ShapeDtypeStruct((NT, TO, Wo, Coutp), jnp.bfloat16),
                   jax.ShapeDtypeStruct((NT, 2, Coutp), jnp.float32)),
        grid=(NT,),
        in_specs=[pl.BlockSpec((1, TO, Wo, Coutp), lambda i: (i, 0, 0, 0)),
                  pl.BlockSpec((1, 1, Wo, Coutp), lambda i: (i, 0, 0, 0)),
                  pl.BlockSpec((1, 1, Wo, Coutp), lambda i: (i, 0, 0, 0)),
                  pl.BlockSpec((2, Coutp), lambda i: (0, 0)),
                  pl.BlockSpec((1, Coutp), lambda i: (0, 0)),
                  pl.BlockSpec((1, Coutp), lambda i: (0, 0)),
                  pl.BlockSpec((9, Coutp, Coutp), lambda i: (0, 0, 0))],
        out_specs=(pl.BlockSpec((1, TO, Wo, Coutp), lambda i: (i, 0, 0, 0)),
                   pl.BlockSpec((1, 2, Coutp), lambda i: (i, 0, 0))),
        scratch_shapes=[pltpu.VMEM((TO + 2, Wo + 2, Coutp), jnp.bfloat16),
                        pltpu.VMEM((M, Coutp), jnp.float32)],
        compiler_params=_mosaic_params(),
    )(y1, top, bot, stats1, gamma, beta, w9)


def _bn_add_relu_call(y2, stats2, gamma, beta, xs, w3, b3, TO, Wo, m_total, use_conv):
    NT = y2.shape[0]
    Coutp = y2.shape[-1]
    Cs = xs.shape[-1]
    in_specs = [pl.BlockSpec((1, TO, Wo, Coutp), lambda i: (i, 0, 0, 0)),
                pl.BlockSpec((2, Coutp), lambda i: (0, 0)),
                pl.BlockSpec((1, Coutp), lambda i: (0, 0)),
                pl.BlockSpec((1, Coutp), lambda i: (0, 0)),
                pl.BlockSpec((1, TO, Wo, Cs), lambda i: (i, 0, 0, 0))]
    args = [y2, stats2, gamma, beta, xs]
    if use_conv:
        in_specs += [pl.BlockSpec((Cs, Coutp), lambda i: (0, 0)),
                     pl.BlockSpec((1, Coutp), lambda i: (0, 0))]
        args += [w3, b3]
    kernel = functools.partial(_bn2_add_relu_kernel, TO=TO, Wo=Wo,
                               m_total=float(m_total), use_conv=use_conv)
    return pl.pallas_call(
        kernel,
        out_shape=jax.ShapeDtypeStruct((NT, TO, Wo, Coutp), jnp.float32),
        grid=(NT,),
        in_specs=in_specs,
        out_specs=pl.BlockSpec((1, TO, Wo, Coutp), lambda i: (i, 0, 0, 0)),
        compiler_params=_mosaic_params(),
    )(*args)


# ----------------------------- parameter packing ------------------------------ #

def _pad2(a, r, c):
    return jnp.pad(a, ((0, r - a.shape[0]), (0, c - a.shape[1])))


def _pack_conv3x3(w_oihw, cin_p, cout_p):
    # (Cout, Cin, 3, 3) -> (9, Cin_p, Cout_p) bf16, zero-padded channels
    cout, cin = w_oihw.shape[0], w_oihw.shape[1]
    w = jnp.transpose(w_oihw, (2, 3, 1, 0)).reshape(9, cin, cout)
    w = jnp.pad(w, ((0, 0), (0, cin_p - cin), (0, cout_p - cout)))
    return w.astype(jnp.bfloat16)


# ------------------------------- Residual module ------------------------------ #

class Residual:
    """JAX/Pallas port of the PyTorch Residual block (training-mode BatchNorm)."""

    def __init__(self, in_channels, out_channels, use_1x1conv=False, stride=1, *, key):
        if not use_1x1conv and (in_channels != out_channels or stride != 1):
            raise ValueError("identity shortcut requires in_channels == out_channels "
                             "and stride == 1 (set use_1x1conv=True otherwise)")
        k1, k2, k3 = jax.random.split(key, 3)
        self.stride = int(stride)
        self.use_1x1conv = use_1x1conv
        self.in_channels = in_channels
        self.out_channels = out_channels

        def conv_init(k, c_out, c_in, kh, kw):
            # PyTorch Conv2d default: U(-1/sqrt(fan_in), 1/sqrt(fan_in))
            fan = c_in * kh * kw
            bound = 1.0 / (fan ** 0.5)
            kw_, kb_ = jax.random.split(k)
            w = jax.random.uniform(kw_, (c_out, c_in, kh, kw), jnp.float32, -bound, bound)
            b = jax.random.uniform(kb_, (c_out,), jnp.float32, -bound, bound)
            return w, b

        self.w1, self.b1 = conv_init(k1, out_channels, in_channels, 3, 3)
        self.w2, self.b2 = conv_init(k2, out_channels, out_channels, 3, 3)
        if use_1x1conv:
            self.w3, self.b3 = conv_init(k3, out_channels, in_channels, 1, 1)
        else:
            self.w3, self.b3 = None, None
        self.gamma1 = jnp.ones((out_channels,), jnp.float32)
        self.beta1 = jnp.zeros((out_channels,), jnp.float32)
        self.gamma2 = jnp.ones((out_channels,), jnp.float32)
        self.beta2 = jnp.zeros((out_channels,), jnp.float32)

        # ---- kernel-ready packed parameters (lane-dense channel padding) ----
        self.cin_p = _round_up(in_channels, LANE)
        self.cout_p = _round_up(out_channels, LANE)
        self.w1_k = _pack_conv3x3(self.w1, self.cin_p, self.cout_p)
        self.w2_k = _pack_conv3x3(self.w2, self.cout_p, self.cout_p)
        # conv1/conv2 biases are dropped on the kernel path: training-mode BN's mean
        # subtraction cancels them exactly.  The 1x1 shortcut (no BN) keeps its bias.
        if use_1x1conv:
            w3 = jnp.transpose(self.w3, (2, 3, 1, 0)).reshape(in_channels, out_channels)
            self.w3_k = _pad2(w3, self.cin_p, self.cout_p).astype(jnp.bfloat16)
            self.b3_k = _pad2(self.b3.reshape(1, -1), 1, self.cout_p)
        else:
            self.w3_k, self.b3_k = None, None
        self.gamma1_k = _pad2(self.gamma1.reshape(1, -1), 1, self.cout_p)
        self.beta1_k = _pad2(self.beta1.reshape(1, -1), 1, self.cout_p)
        self.gamma2_k = _pad2(self.gamma2.reshape(1, -1), 1, self.cout_p)
        self.beta2_k = _pad2(self.beta2.reshape(1, -1), 1, self.cout_p)

    def __call__(self, x_nchw):
        N, Cin, H, W = x_nchw.shape
        s = self.stride
        Cinp, Coutp = self.cin_p, self.cout_p
        x = jnp.transpose(x_nchw, (0, 2, 3, 1)).astype(jnp.float32)   # NCHW -> NHWC
        xb = x.astype(jnp.bfloat16)

        Ho = (H + 2 - 3) // s + 1
        Wo = (W + 2 - 3) // s + 1
        halo = 2 // s                 # extra rows/cols a parity group needs (= max tap//s)
        Hg, Wg = Ho + halo, Wo + halo
        TO = _pick_tile(Ho, Wo)
        T = Ho // TO
        NT = N * T
        m_total = N * Ho * Wo

        # conv-pad (=1), channel-pad to a lane multiple, bf16; split into s*s parity
        # groups and row-tiles (each tile carries its own halo rows) -> Blocked specs.
        # TODO(synk): do the stride deinterleave + halo duplication with in-kernel
        # strided pl.ds / manual DMA instead of these wrapper-side bf16 copies.
        Hp, Wp = max(H + 2, s * Hg), max(W + 2, s * Wg)
        xpad = jnp.zeros((N, Hp, Wp, Cinp), jnp.bfloat16)
        xpad = xpad.at[:, 1:1 + H, 1:1 + W, :Cin].set(xb)
        groups = [xpad[:, gr::s, gc::s, :][:, :Hg, :Wg, :]
                  for gr in range(s) for gc in range(s)]
        groups_t = [
            jnp.stack([g[:, t * TO:t * TO + TO + halo] for t in range(T)], axis=1)
            .reshape(NT, TO + halo, Wg, Cinp)
            for g in groups]

        # conv1 (3x3, stride s) + per-tile partial BN1 stats
        y1, ps1 = _conv1_call(groups_t, self.w1_k, TO, Wo, stride=s)
        stats1 = jnp.sum(ps1, axis=0)                       # tiny (2, Coutp) reduce

        # halo rows of y1 (row above / below each tile) for the fused conv2 kernel
        y1_5 = y1.reshape(N, T, TO, Wo, Coutp)
        zrow = jnp.zeros((N, 1, 1, Wo, Coutp), jnp.bfloat16)
        top = jnp.concatenate([zrow, y1_5[:, :-1, TO - 1:TO]], axis=1
                              ).reshape(NT, 1, Wo, Coutp)
        bot = jnp.concatenate([y1_5[:, 1:, 0:1], zrow], axis=1
                              ).reshape(NT, 1, Wo, Coutp)

        # conv2 (3x3, stride 1) with bn1+ReLU+pad fused in-kernel, + partial BN2 stats
        y2, ps2 = _conv2_call(y1, top, bot, stats1, self.gamma1_k, self.beta1_k,
                              self.w2_k, TO, Wo, T, m_total)
        stats2 = jnp.sum(ps2, axis=0)

        # shortcut operand: strided, channel-padded bf16 input, row-tiled
        if self.use_1x1conv:
            xs = jnp.zeros((N, Ho, Wo, Cinp), jnp.bfloat16)
            xs = xs.at[..., :Cin].set(xb[:, ::s, ::s, :][:, :Ho, :Wo, :])
        else:
            xs = jnp.zeros((N, H, W, Coutp), jnp.bfloat16).at[..., :Cin].set(xb)
        xs = xs.reshape(NT, TO, Wo, xs.shape[-1])

        # bn2 + fused shortcut (1x1 conv on MXU or identity) + add + ReLU
        out = _bn_add_relu_call(y2, stats2, self.gamma2_k, self.beta2_k, xs,
                                self.w3_k, self.b3_k, TO, Wo, m_total,
                                self.use_1x1conv)

        out = out.reshape(N, Ho, Wo, Coutp)[..., :self.out_channels]
        return jnp.transpose(out, (0, 3, 1, 2))              # NHWC -> NCHW


# ----------------------------- pure-JAX references ---------------------------- #

def _ref_f32(block, x_nchw):
    """Exact f32 PyTorch training-mode semantics."""
    x = jnp.transpose(x_nchw, (0, 2, 3, 1)).astype(jnp.float32)

    def conv(a, w_oihw, b, stride, pad):
        w = jnp.transpose(w_oihw, (2, 3, 1, 0))
        y = lax.conv_general_dilated(
            a, w, (stride, stride), [(pad, pad), (pad, pad)],
            dimension_numbers=("NHWC", "HWIO", "NHWC"),
            preferred_element_type=jnp.float32)
        return y + b

    def bn(y, g, bt):
        m = jnp.mean(y, axis=(0, 1, 2), keepdims=True)
        v = jnp.mean((y - m) ** 2, axis=(0, 1, 2), keepdims=True)
        return (y - m) * lax.rsqrt(v + BN_EPS) * g + bt

    y = jax.nn.relu(bn(conv(x, block.w1, block.b1, block.stride, 1),
                       block.gamma1, block.beta1))
    y = bn(conv(y, block.w2, block.b2, 1, 1), block.gamma2, block.beta2)
    sc = conv(x, block.w3, block.b3, block.stride, 0) if block.use_1x1conv else x
    return jnp.transpose(jax.nn.relu(y + sc), (0, 3, 1, 2))


def _ref_matched(block, x_nchw):
    """Matches the kernels' precision chain: bf16 matmul operands and bf16 storage
    of conv outputs / bn1 activation / shortcut input, f32 accumulation + BN math,
    conv1/conv2 biases dropped (training-mode BN cancels them exactly)."""
    f32, bf16 = jnp.float32, jnp.bfloat16
    x = jnp.transpose(x_nchw, (0, 2, 3, 1)).astype(f32)
    xb = x.astype(bf16)

    def conv(a_bf16, w_oihw, stride, pad):
        w = jnp.transpose(w_oihw, (2, 3, 1, 0)).astype(bf16)
        return lax.conv_general_dilated(
            a_bf16, w, (stride, stride), [(pad, pad), (pad, pad)],
            dimension_numbers=("NHWC", "HWIO", "NHWC"),
            preferred_element_type=f32)

    def bn(y_bf16, g, b):   # single-pass batch-stat BN, like the kernels
        y = y_bf16.astype(f32)
        m = jnp.mean(y, axis=(0, 1, 2), keepdims=True)
        v = jnp.mean(y * y, axis=(0, 1, 2), keepdims=True) - m * m
        sc = g * lax.rsqrt(v + BN_EPS)
        return y * sc + (b - m * sc)

    y1 = conv(xb, block.w1, block.stride, 1).astype(bf16)
    h1 = jax.nn.relu(bn(y1, block.gamma1, block.beta1)).astype(bf16)
    y2 = conv(h1, block.w2, 1, 1).astype(bf16)
    yn = bn(y2, block.gamma2, block.beta2)
    if block.use_1x1conv:
        sc = conv(xb, block.w3, block.stride, 0) + block.b3
    else:
        sc = xb.astype(f32)
    return jnp.transpose(jax.nn.relu(yn + sc), (0, 3, 1, 2))


# ------------------------------------ main ------------------------------------ #

if __name__ == "__main__":
    key = jax.random.PRNGKey(0)
    kx, kp = jax.random.split(key)

    # exercise the 1x1-conv shortcut + stride-2 path
    x = jax.random.normal(kx, (2, 4, 16, 16), jnp.float32)
    block = Residual(in_channels=4, out_channels=8, use_1x1conv=True, stride=2, key=kp)
    out = jax.block_until_ready(block(x))
    assert out.shape == (2, 8, 8, 8), out.shape

    # check against a precision-matched reference (bf16 operands + bf16 intermediates)
    ref_m = _ref_matched(block, x)
    err_m = float(jnp.max(jnp.abs(out - ref_m)))
    assert err_m < 3e-2, f"mismatch vs precision-matched reference: {err_m}"

    # bf16-rounding-limited check against the exact f32 PyTorch semantics
    ref_f = _ref_f32(block, x)
    rel = float(jnp.linalg.norm(out - ref_f) / (jnp.linalg.norm(ref_f) + 1e-12))
    assert rel < 5e-2, f"relative error vs f32 reference too large: {rel}"

    # exercise the (guarded) identity-shortcut path; Ho=16 -> 2 row-tiles, so the
    # fused conv2 halo logic (non-zero top/bot rows) is exercised too.
    x2 = jax.random.normal(kx, (2, 8, 16, 16), jnp.float32)
    block2 = Residual(in_channels=8, out_channels=8, use_1x1conv=False, stride=1, key=kp)
    out2 = jax.block_until_ready(block2(x2))
    assert out2.shape == (2, 8, 16, 16), out2.shape
    ref2 = _ref_matched(block2, x2)
    err2 = float(jnp.max(jnp.abs(out2 - ref2)))
    assert err2 < 3e-2, f"identity-path mismatch: {err2}"
    ref2f = _ref_f32(block2, x2)
    rel2 = float(jnp.linalg.norm(out2 - ref2f) / (jnp.linalg.norm(ref2f) + 1e-12))
    assert rel2 < 5e-2, f"identity-path relative error vs f32 reference: {rel2}"

    print("KERNEL_OK")
</pallas_src>

<mosaic_0001>
module attributes {stable_mosaic.version = 11 : i64} {
  func.func @_conv1_kernel(%arg0: i32, %arg1: memref<1x9x9x128xbf16, #tpu.memory_space<vmem>>, %arg2: memref<1x9x9x128xbf16, #tpu.memory_space<vmem>>, %arg3: memref<1x9x9x128xbf16, #tpu.memory_space<vmem>>, %arg4: memref<1x9x9x128xbf16, #tpu.memory_space<vmem>>, %arg5: memref<9x128x128xbf16, #tpu.memory_space<vmem>>, %arg6: memref<1x8x8x128xbf16, #tpu.memory_space<vmem>>, %arg7: memref<1x2x128xf32, #tpu.memory_space<vmem>>, %arg8: memref<64x128xf32, #tpu.memory_space<vmem>>) attributes {dimension_semantics = [#tpu.dimension_semantics<parallel>], iteration_bounds = array<i64: 2>, scalar_prefetch = 0 : i64, scratch_operands = 1 : i64, tpu.core_type = #tpu.core_type<tc>, window_params = [{transform_indices = @transform_0, window_bounds = array<i64: 1, 9, 9, 128>}, {transform_indices = @transform_1, window_bounds = array<i64: 1, 9, 9, 128>}, {transform_indices = @transform_2, window_bounds = array<i64: 1, 9, 9, 128>}, {transform_indices = @transform_3, window_bounds = array<i64: 1, 9, 9, 128>}, {pipeline_mode = #tpu.pipeline_mode<synchronous>, transform_indices = @transform_4, window_bounds = array<i64: 9, 128, 128>}, {transform_indices = @transform_5, window_bounds = array<i64: 1, 8, 8, 128>}, {transform_indices = @transform_6, window_bounds = array<i64: 1, 2, 128>}]} {
    %c0 = arith.constant 0 : index
    %c0_0 = arith.constant 0 : index
    %c0_1 = arith.constant 0 : index
    %c0_2 = arith.constant 0 : index
    %0 = vector.load %arg1[%c0, %c0_0, %c0_1, %c0_2] : memref<1x9x9x128xbf16, #tpu.memory_space<vmem>>, vector<1x8x8x128xbf16>
    %1 = vector.shape_cast %0 : vector<1x8x8x128xbf16> to vector<8x8x128xbf16>
    %2 = vector.shape_cast %1 : vector<8x8x128xbf16> to vector<64x128xbf16>
    %c0_3 = arith.constant 0 : index
    %c0_4 = arith.constant 0 : index
    %c0_5 = arith.constant 0 : index
    %3 = vector.load %arg5[%c0_3, %c0_4, %c0_5] : memref<9x128x128xbf16, #tpu.memory_space<vmem>>, vector<1x128x128xbf16>
    %4 = vector.shape_cast %3 : vector<1x128x128xbf16> to vector<128x128xbf16>
    %cst = arith.constant dense<0.000000e+00> : vector<64x128xf32>
    %5 = tpu.matmul %2, %4, %cst {dimension_numbers = #tpu.dot_dimension_numbers<[1], [0], [0], [1], [0, 0, 1, 1], [], []>} : vector<64x128xbf16>, vector<128x128xbf16>, vector<64x128xf32> -> vector<64x128xf32>
    %c0_6 = arith.constant 0 : index
    %c0_7 = arith.constant 0 : index
    %6 = vector.load %arg8[%c0_6, %c0_7] : memref<64x128xf32, #tpu.memory_space<vmem>>, vector<64x128xf32>
    tpu.vector_store %arg8[%c0_6, %c0_7], %5 {strides = array<i32>} : memref<64x128xf32, #tpu.memory_space<vmem>>, vector<64x128xf32>,
    %c0_8 = arith.constant 0 : index
    %c0_9 = arith.constant 0 : index
    %c0_10 = arith.constant 0 : index
    %c0_11 = arith.constant 0 : index
    %7 = vector.load %arg2[%c0_8, %c0_9, %c0_10, %c0_11] : memref<1x9x9x128xbf16, #tpu.memory_space<vmem>>, vector<1x8x8x128xbf16>
    %8 = vector.shape_cast %7 : vector<1x8x8x128xbf16> to vector<8x8x128xbf16>
    %9 = vector.shape_cast %8 : vector<8x8x128xbf16> to vector<64x128xbf16>
    %c1 = arith.constant 1 : index
    %c0_12 = arith.constant 0 : index
    %c0_13 = arith.constant 0 : index
    %10 = vector.load %arg5[%c1, %c0_12, %c0_13] : memref<9x128x128xbf16, #tpu.memory_space<vmem>>, vector<1x128x128xbf16>
    %11 = vector.shape_cast %10 : vector<1x128x128xbf16> to vector<128x128xbf16>
    %cst_14 = arith.constant dense<0.000000e+00> : vector<64x128xf32>
    %12 = tpu.matmul %9, %11, %cst_14 {dimension_numbers = #tpu.dot_dimension_numbers<[1], [0], [0], [1], [0, 0, 1, 1], [], []>} : vector<64x128xbf16>, vector<128x128xbf16>, vector<64x128xf32> -> vector<64x128xf32>
    %c0_15 = arith.constant 0 : index
    %c0_16 = arith.constant 0 : index
    %13 = vector.load %arg8[%c0_15, %c0_16] : memref<64x128xf32, #tpu.memory_space<vmem>>, vector<64x128xf32>
    %14 = arith.addf %13, %12 : vector<64x128xf32>
    %c0_17 = arith.constant 0 : index
    %c0_18 = arith.constant 0 : index
    %15 = vector.load %arg8[%c0_17, %c0_18] : memref<64x128xf32, #tpu.memory_space<vmem>>, vector<64x128xf32>
    tpu.vector_store %arg8[%c0_17, %c0_18], %14 {strides = array<i32>} : memref<64x128xf32, #tpu.memory_space<vmem>>, vector<64x128xf32>,
    %c0_19 = arith.constant 0 : index
    %c0_20 = arith.constant 0 : index
    %c1_21 = arith.constant 1 : index
    %c0_22 = arith.constant 0 : index
    %16 = vector.load %arg1[%c0_19, %c0_20, %c1_21, %c0_22] : memref<1x9x9x128xbf16, #tpu.memory_space<vmem>>, vector<1x8x8x128xbf16>
    %17 = vector.shape_cast %16 : vector<1x8x8x128xbf16> to vector<8x8x128xbf16>
    %18 = vector.shape_cast %17 : vector<8x8x128xbf16> to vector<64x128xbf16>
    %c2 = arith.constant 2 : index
    %c0_23 = arith.constant 0 : index
    %c0_24 = arith.constant 0 : index
    %19 = vector.load %arg5[%c2, %c0_23, %c0_24] : memref<9x128x128xbf16, #tpu.memory_space<vmem>>, vector<1x128x128xbf16>
    %20 = vector.shape_cast %19 : vector<1x128x128xbf16> to vector<128x128xbf16>
    %cst_25 = arith.constant dense<0.000000e+00> : vector<64x128xf32>
    %21 = tpu.matmul %18, %20, %cst_25 {dimension_numbers = #tpu.dot_dimension_numbers<[1], [0], [0], [1], [0, 0, 1, 1], [], []>} : vector<64x128xbf16>, vector<128x128xbf16>, vector<64x128xf32> -> vector<64x128xf32>
    %c0_26 = arith.constant 0 : index
    %c0_27 = arith.constant 0 : index
    %22 = vector.load %arg8[%c0_26, %c0_27] : memref<64x128xf32, #tpu.memory_space<vmem>>, vector<64x128xf32>
    %23 = arith.addf %22, %21 : vector<64x128xf32>
    %c0_28 = arith.constant 0 : index
    %c0_29 = arith.constant 0 : index
    %24 = vector.load %arg8[%c0_28, %c0_29] : memref<64x128xf32, #tpu.memory_space<vmem>>, vector<64x128xf32>
    tpu.vector_store %arg8[%c0_28, %c0_29], %23 {strides = array<i32>} : memref<64x128xf32, #tpu.memory_space<vmem>>, vector<64x128xf32>,
    %c0_30 = arith.constant 0 : index
    %c0_31 = arith.constant 0 : index
    %c0_32 = arith.constant 0 : index
    %c0_33 = arith.constant 0 : index
    %25 = vector.load %arg3[%c0_30, %c0_31, %c0_32, %c0_33] : memref<1x9x9x128xbf16, #tpu.memory_space<vmem>>, vector<1x8x8x128xbf16>
    %26 = vector.shape_cast %25 : vector<1x8x8x128xbf16> to vector<8x8x128xbf16>
    %27 = vector.shape_cast %26 : vector<8x8x128xbf16> to vector<64x128xbf16>
    %c3 = arith.constant 3 : index
    %c0_34 = arith.constant 0 : index
    %c0_35 = arith.constant 0 : index
    %28 = vector.load %arg5[%c3, %c0_34, %c0_35] : memref<9x128x128xbf16, #tpu.memory_space<vmem>>, vector<1x128x128xbf16>
    %29 = vector.shape_cast %28 : vector<1x128x128xbf16> to vector<128x128xbf16>
    %cst_36 = arith.constant dense<0.000000e+00> : vector<64x128xf32>
    %30 = tpu.matmul %27, %29, %cst_36 {dimension_numbers = #tpu.dot_dimension_numbers<[1], [0], [0], [1], [0, 0, 1, 1], [], []>} : vector<64x128xbf16>, vector<128x128xbf16>, vector<64x128xf32> -> vector<64x128xf32>
    %c0_37 = arith.constant 0 : index
    %c0_38 = arith.constant 0 : index
    %31 = vector.load %arg8[%c0_37, %c0_38] : memref<64x128xf32, #tpu.memory_space<vmem>>, vector<64x128xf32>
    %32 = arith.addf %31, %30 : vector<64x128xf32>
    %c0_39 = arith.constant 0 : index
    %c0_40 = arith.constant 0 : index
    %33 = vector.load %arg8[%c0_39, %c0_40] : memref<64x128xf32, #tpu.memory_space<vmem>>, vector<64x128xf32>
    tpu.vector_store %arg8[%c0_39, %c0_40], %32 {strides = array<i32>} : memref<64x128xf32, #tpu.memory_space<vmem>>, vector<64x128xf32>,
    %c0_41 = arith.constant 0 : index
    %c0_42 = arith.constant 0 : index
    %c0_43 = arith.constant 0 : index
    %c0_44 = arith.constant 0 : index
    %34 = vector.load %arg4[%c0_41, %c0_42, %c0_43, %c0_44] : memref<1x9x9x128xbf16, #tpu.memory_space<vmem>>, vector<1x8x8x128xbf16>
    %35 = vector.shape_cast %34 : vector<1x8x8x128xbf16> to vector<8x8x128xbf16>
    %36 = vector.shape_cast %35 : vector<8x8x128xbf16> to vector<64x128xbf16>
    %c4 = arith.constant 4 : index
    %c0_45 = arith.constant 0 : index
    %c0_46 = arith.constant 0 : index
    %37 = vector.load %arg5[%c4, %c0_45, %c0_46] : memref<9x128x128xbf16, #tpu.memory_space<vmem>>, vector<1x128x128xbf16>
    %38 = vector.shape_cast %37 : vector<1x128x128xbf16> to vector<128x128xbf16>
    %cst_47 = arith.constant dense<0.000000e+00> : vector<64x128xf32>
    %39 = tpu.matmul %36, %38, %cst_47 {dimension_numbers = #tpu.dot_dimension_numbers<[1], [0], [0], [1], [0, 0, 1, 1], [], []>} : vector<64x128xbf16>, vector<128x128xbf16>, vector<64x128xf32> -> vector<64x128xf32>
    %c0_48 = arith.constant 0 : index
    %c0_49 = arith.constant 0 : index
    %40 = vector.load %arg8[%c0_48, %c0_49] : memref<64x128xf32, #tpu.memory_space<vmem>>, vector<64x128xf32>
    %41 = arith.addf %40, %39 : vector<64x128xf32>
    %c0_50 = arith.constant 0 : index
    %c0_51 = arith.constant 0 : index
    %42 = vector.load %arg8[%c0_50, %c0_51] : memref<64x128xf32, #tpu.memory_space<vmem>>, vector<64x128xf32>
    tpu.vector_store %arg8[%c0_50, %c0_51], %41 {strides = array<i32>} : memref<64x128xf32, #tpu.memory_space<vmem>>, vector<64x128xf32>,
    %c0_52 = arith.constant 0 : index
    %c0_53 = arith.constant 0 : index
    %c1_54 = arith.constant 1 : index
    %c0_55 = arith.constant 0 : index
    %43 = vector.load %arg3[%c0_52, %c0_53, %c1_54, %c0_55] : memref<1x9x9x128xbf16, #tpu.memory_space<vmem>>, vector<1x8x8x128xbf16>
    %44 = vector.shape_cast %43 : vector<1x8x8x128xbf16> to vector<8x8x128xbf16>
    %45 = vector.shape_cast %44 : vector<8x8x128xbf16> to vector<64x128xbf16>
    %c5 = arith.constant 5 : index
    %c0_56 = arith.constant 0 : index
    %c0_57 = arith.constant 0 : index
    %46 = vector.load %arg5[%c5, %c0_56, %c0_57] : memref<9x128x128xbf16, #tpu.memory_space<vmem>>, vector<1x128x128xbf16>
    %47 = vector.shape_cast %46 : vector<1x128x128xbf16> to vector<128x128xbf16>
    %cst_58 = arith.constant dense<0.000000e+00> : vector<64x128xf32>
    %48 = tpu.matmul %45, %47, %cst_58 {dimension_numbers = #tpu.dot_dimension_numbers<[1], [0], [0], [1], [0, 0, 1, 1], [], []>} : vector<64x128xbf16>, vector<128x128xbf16>, vector<64x128xf32> -> vector<64x128xf32>
    %c0_59 = arith.constant 0 : index
    %c0_60 = arith.constant 0 : index
    %49 = vector.load %arg8[%c0_59, %c0_60] : memref<64x128xf32, #tpu.memory_space<vmem>>, vector<64x128xf32>
    %50 = arith.addf %49, %48 : vector<64x128xf32>
    %c0_61 = arith.constant 0 : index
    %c0_62 = arith.constant 0 : index
    %51 = vector.load %arg8[%c0_61, %c0_62] : memref<64x128xf32, #tpu.memory_space<vmem>>, vector<64x128xf32>
    tpu.vector_store %arg8[%c0_61, %c0_62], %50 {strides = array<i32>} : memref<64x128xf32, #tpu.memory_space<vmem>>, vector<64x128xf32>,
    %c0_63 = arith.constant 0 : index
    %c1_64 = arith.constant 1 : index
    %c0_65 = arith.constant 0 : index
    %c0_66 = arith.constant 0 : index
    %52 = vector.load %arg1[%c0_63, %c1_64, %c0_65, %c0_66] : memref<1x9x9x128xbf16, #tpu.memory_space<vmem>>, vector<1x8x8x128xbf16>
    %53 = vector.shape_cast %52 : vector<1x8x8x128xbf16> to vector<8x8x128xbf16>
    %54 = vector.shape_cast %53 : vector<8x8x128xbf16> to vector<64x128xbf16>
    %c6 = arith.constant 6 : index
    %c0_67 = arith.constant 0 : index
    %c0_68 = arith.constant 0 : index
    %55 = vector.load %arg5[%c6, %c0_67, %c0_68] : memref<9x128x128xbf16, #tpu.memory_space<vmem>>, vector<1x128x128xbf16>
    %56 = vector.shape_cast %55 : vector<1x128x128xbf16> to vector<128x128xbf16>
    %cst_69 = arith.constant dense<0.000000e+00> : vector<64x128xf32>
    %57 = tpu.matmul %54, %56, %cst_69 {dimension_numbers = #tpu.dot_dimension_numbers<[1], [0], [0], [1], [0, 0, 1, 1], [], []>} : vector<64x128xbf16>, vector<128x128xbf16>, vector<64x128xf32> -> vector<64x128xf32>
    %c0_70 = arith.constant 0 : index
    %c0_71 = arith.constant 0 : index
    %58 = vector.load %arg8[%c0_70, %c0_71] : memref<64x128xf32, #tpu.memory_space<vmem>>, vector<64x128xf32>
    %59 = arith.addf %58, %57 : vector<64x128xf32>
    %c0_72 = arith.constant 0 : index
    %c0_73 = arith.constant 0 : index
    %60 = vector.load %arg8[%c0_72, %c0_73] : memref<64x128xf32, #tpu.memory_space<vmem>>, vector<64x128xf32>
    tpu.vector_store %arg8[%c0_72, %c0_73], %59 {strides = array<i32>} : memref<64x128xf32, #tpu.memory_space<vmem>>, vector<64x128xf32>,
    %c0_74 = arith.constant 0 : index
    %c1_75 = arith.constant 1 : index
    %c0_76 = arith.constant 0 : index
    %c0_77 = arith.constant 0 : index
    %61 = vector.load %arg2[%c0_74, %c1_75, %c0_76, %c0_77] : memref<1x9x9x128xbf16, #tpu.memory_space<vmem>>, vector<1x8x8x128xbf16>
    %62 = vector.shape_cast %61 : vector<1x8x8x128xbf16> to vector<8x8x128xbf16>
    %63 = vector.shape_cast %62 : vector<8x8x128xbf16> to vector<64x128xbf16>
    %c7 = arith.constant 7 : index
    %c0_78 = arith.constant 0 : index
    %c0_79 = arith.constant 0 : index
    %64 = vector.load %arg5[%c7, %c0_78, %c0_79] : memref<9x128x128xbf16, #tpu.memory_space<vmem>>, vector<1x128x128xbf16>
    %65 = vector.shape_cast %64 : vector<1x128x128xbf16> to vector<128x128xbf16>
    %cst_80 = arith.constant dense<0.000000e+00> : vector<64x128xf32>
    %66 = tpu.matmul %63, %65, %cst_80 {dimension_numbers = #tpu.dot_dimension_numbers<[1], [0], [0], [1], [0, 0, 1, 1], [], []>} : vector<64x128xbf16>, vector<128x128xbf16>, vector<64x128xf32> -> vector<64x128xf32>
    %c0_81 = arith.constant 0 : index
    %c0_82 = arith.constant 0 : index
    %67 = vector.load %arg8[%c0_81, %c0_82] : memref<64x128xf32, #tpu.memory_space<vmem>>, vector<64x128xf32>
    %68 = arith.addf %67, %66 : vector<64x128xf32>
    %c0_83 = arith.constant 0 : index
    %c0_84 = arith.constant 0 : index
    %69 = vector.load %arg8[%c0_83, %c0_84] : memref<64x128xf32, #tpu.memory_space<vmem>>, vector<64x128xf32>
    tpu.vector_store %arg8[%c0_83, %c0_84], %68 {strides = array<i32>} : memref<64x128xf32, #tpu.memory_space<vmem>>, vector<64x128xf32>,
    %c0_85 = arith.constant 0 : index
    %c1_86 = arith.constant 1 : index
    %c1_87 = arith.constant 1 : index
    %c0_88 = arith.constant 0 : index
    %70 = vector.load %arg1[%c0_85, %c1_86, %c1_87, %c0_88] : memref<1x9x9x128xbf16, #tpu.memory_space<vmem>>, vector<1x8x8x128xbf16>
    %71 = vector.shape_cast %70 : vector<1x8x8x128xbf16> to vector<8x8x128xbf16>
    %72 = vector.shape_cast %71 : vector<8x8x128xbf16> to vector<64x128xbf16>
    %c8 = arith.constant 8 : index
    %c0_89 = arith.constant 0 : index
    %c0_90 = arith.constant 0 : index
    %73 = vector.load %arg5[%c8, %c0_89, %c0_90] : memref<9x128x128xbf16, #tpu.memory_space<vmem>>, vector<1x128x128xbf16>
    %74 = vector.shape_cast %73 : vector<1x128x128xbf16> to vector<128x128xbf16>
    %cst_91 = arith.constant dense<0.000000e+00> : vector<64x128xf32>
    %75 = tpu.matmul %72, %74, %cst_91 {dimension_numbers = #tpu.dot_dimension_numbers<[1], [0], [0], [1], [0, 0, 1, 1], [], []>} : vector<64x128xbf16>, vector<128x128xbf16>, vector<64x128xf32> -> vector<64x128xf32>
    %c0_92 = arith.constant 0 : index
    %c0_93 = arith.constant 0 : index
    %76 = vector.load %arg8[%c0_92, %c0_93] : memref<64x128xf32, #tpu.memory_space<vmem>>, vector<64x128xf32>
    %77 = arith.addf %76, %75 : vector<64x128xf32>
    %c0_94 = arith.constant 0 : index
    %c0_95 = arith.constant 0 : index
    %78 = vector.load %arg8[%c0_94, %c0_95] : memref<64x128xf32, #tpu.memory_space<vmem>>, vector<64x128xf32>
    tpu.vector_store %arg8[%c0_94, %c0_95], %77 {strides = array<i32>} : memref<64x128xf32, #tpu.memory_space<vmem>>, vector<64x128xf32>,
    %c0_96 = arith.constant 0 : index
    %c0_97 = arith.constant 0 : index
    %79 = vector.load %arg8[%c0_96, %c0_97] : memref<64x128xf32, #tpu.memory_space<vmem>>, vector<64x128xf32>
    %80 = arith.truncf %79 : vector<64x128xf32> to vector<64x128xbf16>
    %81 = vector.shape_cast %80 : vector<64x128xbf16> to vector<8x8x128xbf16>
    %c0_98 = arith.constant 0 : index
    %c0_99 = arith.constant 0 : index
    %c0_100 = arith.constant 0 : index
    %c0_101 = arith.constant 0 : index
    %82 = vector.load %arg6[%c0_98, %c0_99, %c0_100, %c0_101] : memref<1x8x8x128xbf16, #tpu.memory_space<vmem>>, vector<1x8x8x128xbf16>
    %83 = vector.shape_cast %82 : vector<1x8x8x128xbf16> to vector<8x8x128xbf16>
    %84 = vector.shape_cast %81 : vector<8x8x128xbf16> to vector<1x8x8x128xbf16>
    tpu.vector_store %arg6[%c0_98, %c0_99, %c0_100, %c0_101], %84 {strides = array<i32>} : memref<1x8x8x128xbf16, #tpu.memory_space<vmem>>, vector<1x8x8x128xbf16>,
    %85 = arith.extf %80 : vector<64x128xbf16> to vector<64x128xf32>
    %cst_102 = arith.constant dense<0.000000e+00> : vector<128xf32>
    %86 = vector.multi_reduction <add>, %85, %cst_102 [0] : vector<64x128xf32> to vector<128xf32>
    %87 = vector.shape_cast %86 : vector<128xf32> to vector<1x128xf32>
    %c0_103 = arith.constant 0 : index
    %c0_104 = arith.constant 0 : index
    %c0_105 = arith.constant 0 : index
    %88 = vector.load %arg7[%c0_103, %c0_104, %c0_105] : memref<1x2x128xf32, #tpu.memory_space<vmem>>, vector<1x1x128xf32>
    %89 = vector.shape_cast %88 : vector<1x1x128xf32> to vector<1x128xf32>
    %90 = vector.shape_cast %87 : vector<1x128xf32> to vector<1x1x128xf32>
    tpu.vector_store %arg7[%c0_103, %c0_104, %c0_105], %90 {strides = array<i32>} : memref<1x2x128xf32, #tpu.memory_space<vmem>>, vector<1x1x128xf32>,
    %91 = arith.mulf %85, %85 : vector<64x128xf32>
    %cst_106 = arith.constant dense<0.000000e+00> : vector<128xf32>
    %92 = vector.multi_reduction <add>, %91, %cst_106 [0] : vector<64x128xf32> to vector<128xf32>
    %93 = vector.shape_cast %92 : vector<128xf32> to vector<1x128xf32>
    %c0_107 = arith.constant 0 : index
    %c1_108 = arith.constant 1 : index
    %c0_109 = arith.constant 0 : index
    %94 = vector.load %arg7[%c0_107, %c1_108, %c0_109] : memref<1x2x128xf32, #tpu.memory_space<vmem>>, vector<1x1x128xf32>
    %95 = vector.shape_cast %94 : vector<1x1x128xf32> to vector<1x128xf32>
    %96 = vector.shape_cast %93 : vector<1x128xf32> to vector<1x1x128xf32>
    tpu.vector_store %arg7[%c0_107, %c1_108, %c0_109], %96 {strides = array<i32>} : memref<1x2x128xf32, #tpu.memory_space<vmem>>, vector<1x1x128xf32>,
    return
  }
  func.func @transform_0(%arg0: i32) -> (i32, i32, i32, i32) {
    %c0_i32 = arith.constant 0 : i32
    %c0_i32_0 = arith.constant 0 : i32
    %c0_i32_1 = arith.constant 0 : i32
    %c0_i32_2 = arith.constant 0 : i32
    return %arg0, %c0_i32, %c0_i32_0, %c0_i32_1 : i32, i32, i32, i32
  }
  func.func @transform_1(%arg0: i32) -> (i32, i32, i32, i32) {
    %c0_i32 = arith.constant 0 : i32
    %c0_i32_0 = arith.constant 0 : i32
    %c0_i32_1 = arith.constant 0 : i32
    %c0_i32_2 = arith.constant 0 : i32
    return %arg0, %c0_i32, %c0_i32_0, %c0_i32_1 : i32, i32, i32, i32
  }
  func.func @transform_2(%arg0: i32) -> (i32, i32, i32, i32) {
    %c0_i32 = arith.constant 0 : i32
    %c0_i32_0 = arith.constant 0 : i32
    %c0_i32_1 = arith.constant 0 : i32
    %c0_i32_2 = arith.constant 0 : i32
    return %arg0, %c0_i32, %c0_i32_0, %c0_i32_1 : i32, i32, i32, i32
  }
  func.func @transform_3(%arg0: i32) -> (i32, i32, i32, i32) {
    %c0_i32 = arith.constant 0 : i32
    %c0_i32_0 = arith.constant 0 : i32
    %c0_i32_1 = arith.constant 0 : i32
    %c0_i32_2 = arith.constant 0 : i32
    return %arg0, %c0_i32, %c0_i32_0, %c0_i32_1 : i32, i32, i32, i32
  }
  func.func @transform_4(%arg0: i32) -> (i32, i32, i32) {
    %c0_i32 = arith.constant 0 : i32
    %c0_i32_0 = arith.constant 0 : i32
    %c0_i32_1 = arith.constant 0 : i32
    %c0_i32_2 = arith.constant 0 : i32
    return %c0_i32, %c0_i32_0, %c0_i32_1 : i32, i32, i32
  }
  func.func @transform_5(%arg0: i32) -> (i32, i32, i32, i32) {
    %c0_i32 = arith.constant 0 : i32
    %c0_i32_0 = arith.constant 0 : i32
    %c0_i32_1 = arith.constant 0 : i32
    %c0_i32_2 = arith.constant 0 : i32
    return %arg0, %c0_i32, %c0_i32_0, %c0_i32_1 : i32, i32, i32, i32
  }
  func.func @transform_6(%arg0: i32) -> (i32, i32, i32) {
    %c0_i32 = arith.constant 0 : i32
    %c0_i32_0 = arith.constant 0 : i32
    %c0_i32_1 = arith.constant 0 : i32
    return %arg0, %c0_i32, %c0_i32_0 : i32, i32, i32
  }
}

</mosaic_0001>

<llo_original>
// kernel: tpu_custom_call.1
$region0: #{tpu_custom_call.1}
  #allocation0 [shape = 'u32[]', space=smem, size = 0x4, offset = 0x4, fixed_abs, tag = 'smem constant byte address 0x4 - core index']
  #allocation1 [shape = 'u32[144,128]{1,0:T(1,128)}', space=vmem, size = 0x12000, scoped, tag = 'internal scratch']
  #allocation2 [shape = 'f32[64,128]{1,0:T(8,128)}', space=vmem, size = 0x8000, scoped, tag = 'scratch operand']
  %s0 = inlined_call_operand.vmem [shape: bf16[2,9,9,128], index: 0, kind: input, shape index: {}]
  %s1 = inlined_call_operand.vmem [shape: bf16[2,9,9,128], index: 1, kind: input, shape index: {}]
  %s2 = inlined_call_operand.vmem [shape: bf16[2,9,9,128], index: 2, kind: input, shape index: {}]
  %s3 = inlined_call_operand.vmem [shape: bf16[2,9,9,128], index: 3, kind: input, shape index: {}]
  %s4 = inlined_call_operand.vmem [shape: bf16[9,128,128], index: 4, kind: input, shape index: {}]
  %s5 = inlined_call_operand.hbm [shape: bf16[2,8,8,128], index: 5, kind: output, shape index: {0}]
  %s6 = inlined_call_operand.hbm [shape: f32[2,2,128], index: 6, kind: output, shape index: {1}]
  %7 = xla_tuple %s5, %s6
  %s8 = sld [smem:[#allocation0]]
  $region61: #{tpu_custom_call.1} parent=0
    _
  %s10 = ssub.s32 1, %s8
  %s11 = scalar_select 0, %s10, %s8
  $region1: #{tpu_custom_call.1} parent=0
    #allocation3 [shape = 'u8[32768]{0}', space=vmem, size = 0x8000, scoped, tag = 'output window, operand 0']
    #allocation4 [shape = 's32[2]{0}', space=sflag, size = 0x8, scoped, tag = 'scoped memory for tpu_custom_call.1']
    #allocation5 [shape = 'u8[2048]{0}', space=vmem, size = 0x800, scoped, tag = 'output window, operand 1']
    #allocation6 [shape = 's32[2]{0}', space=sflag, size = 0x8, scoped, tag = 'scoped memory for tpu_custom_call.1']
    %12 = vsyncpa [#allocation4], 0
    %s13 = scalar_lea.sflag [#allocation4], 1
    %14 = vsyncpa %s13, 0
    %15 = vsyncpa [#allocation6], 0
    %s16 = scalar_lea.sflag [#allocation6], 1
    %17 = vsyncpa %s16, 0
    loop: start=0, step=1, limit=4
    $region2: #{tpu_custom_call.1} parent=1 // loop_pre_header
      _
    $region3: #{tpu_custom_call.1} parent=1 // loop_header
      %s19 = sphi 0, %s23
      %p20 = scmp.ge.s32.totalorder %s19, 4
      %s29 = sphi 0, %s31
      %s32 = sphi 0, %s29
      %s33 = sphi 0, %s32
      %s49 = sphi 0, %s33
      %s55 = sphi 0, %s57
      %s58 = sphi 0, %s55
      %s59 = sphi 0, %s58
      %s75 = sphi 0, %s59
      %s81 = sphi 0, %s83
      %s84 = sphi 0, %s81
      %s85 = sphi 0, %s84
      %s101 = sphi 0, %s85
      %s107 = sphi 0, %s109
      %s110 = sphi 0, %s107
      %s111 = sphi 0, %s110
      %s127 = sphi 0, %s111
      %s131 = sphi 0, %s131
      %s133 = sphi 0, %s131
      %s134 = sphi 0, %s133
      %s148 = sphi 0, %s134
      %s154 = sphi 0, %s156
      %s157 = sphi 0, %s154
      %s158 = sphi 0, %s157
      %s174 = sphi 0, %s158
      %s180 = sphi 0, %s182
      %s183 = sphi 0, %s180
      %s184 = sphi 0, %s183
      %s200 = sphi 0, %s184
    $region4: #{tpu_custom_call.1} parent=1 // loop_header_branch
      %22 = sbr.rel (%p20) target = $region8
    $region5: #{tpu_custom_call.1} parent=1 // loop_body
      %s24 = ssub.s32 %s19, 1
      %s25 = ssub.s32 %s19, 2
      %s26 = sadd.s32 %s19, 1
      %s27 = ssub.s32 %s19, %s26
      %p28 = scmp.eq.s32.totalorder %s27, 0
      %s30 = sadd.s32 %s29, 1
      %s31 = scalar_select %p28, %s29, %s30
      %p34 = pneg %p28
      %p35 = scmp.eq.s32.totalorder %s19, 1
      %p36 = por %p34, %p35
      %p37 = scmp.ne.s32.totalorder %s29, %s32
      %p38 = scmp.eq.s32.totalorder %s19, 0
      %p39 = por %p37, %p38
      %p40 = scmp.ne.s32.totalorder %s29, %s32
      %p41 = scmp.eq.s32.totalorder %s24, 1
      %p42 = por %p40, %p41
      %p43 = scmp.ne.s32.totalorder %s32, %s33
      %p44 = scmp.eq.s32.totalorder %s24, 0
      %p45 = por %p43, %p44
      %p46 = scmp.ne.s32.totalorder %s32, %s33
      %p47 = scmp.eq.s32.totalorder %s25, 1
      %p48 = por %p46, %p47
      %p50 = scmp.ne.s32.totalorder %s33, %s49
      %p51 = scmp.eq.s32.totalorder %s25, 0
      %p52 = por %p50, %p51
      %s53 = ssub.s32 %s19, %s26
      %p54 = scmp.eq.s32.totalorder %s53, 0
      %s56 = sadd.s32 %s55, 1
      %s57 = scalar_select %p54, %s55, %s56
      %p60 = pneg %p54
      %p61 = scmp.eq.s32.totalorder %s19, 1
      %p62 = por %p60, %p61
      %p63 = scmp.ne.s32.totalorder %s55, %s58
      %p64 = scmp.eq.s32.totalorder %s19, 0
      %p65 = por %p63, %p64
      %p66 = scmp.ne.s32.totalorder %s55, %s58
      %p67 = scmp.eq.s32.totalorder %s24, 1
      %p68 = por %p66, %p67
      %p69 = scmp.ne.s32.totalorder %s58, %s59
      %p70 = scmp.eq.s32.totalorder %s24, 0
      %p71 = por %p69, %p70
      %p72 = scmp.ne.s32.totalorder %s58, %s59
      %p73 = scmp.eq.s32.totalorder %s25, 1
      %p74 = por %p72, %p73
      %p76 = scmp.ne.s32.totalorder %s59, %s75
      %p77 = scmp.eq.s32.totalorder %s25, 0
      %p78 = por %p76, %p77
      %s79 = ssub.s32 %s19, %s26
      %p80 = scmp.eq.s32.totalorder %s79, 0
      %s82 = sadd.s32 %s81, 1
      %s83 = scalar_select %p80, %s81, %s82
      %p86 = pneg %p80
      %p87 = scmp.eq.s32.totalorder %s19, 1
      %p88 = por %p86, %p87
      %p89 = scmp.ne.s32.totalorder %s81, %s84
      %p90 = scmp.eq.s32.totalorder %s19, 0
      %p91 = por %p89, %p90
      %p92 = scmp.ne.s32.totalorder %s81, %s84
      %p93 = scmp.eq.s32.totalorder %s24, 1
      %p94 = por %p92, %p93
      %p95 = scmp.ne.s32.totalorder %s84, %s85
      %p96 = scmp.eq.s32.totalorder %s24, 0
      %p97 = por %p95, %p96
      %p98 = scmp.ne.s32.totalorder %s84, %s85
      %p99 = scmp.eq.s32.totalorder %s25, 1
      %p100 = por %p98, %p99
      %p102 = scmp.ne.s32.totalorder %s85, %s101
      %p103 = scmp.eq.s32.totalorder %s25, 0
      %p104 = por %p102, %p103
      %s105 = ssub.s32 %s19, %s26
      %p106 = scmp.eq.s32.totalorder %s105, 0
      %s108 = sadd.s32 %s107, 1
      %s109 = scalar_select %p106, %s107, %s108
      %p112 = pneg %p106
      %p113 = scmp.eq.s32.totalorder %s19, 1
      %p114 = por %p112, %p113
      %p115 = scmp.ne.s32.totalorder %s107, %s110
      %p116 = scmp.eq.s32.totalorder %s19, 0
      %p117 = por %p115, %p116
      %p118 = scmp.ne.s32.totalorder %s107, %s110
      %p119 = scmp.eq.s32.totalorder %s24, 1
      %p120 = por %p118, %p119
      %p121 = scmp.ne.s32.totalorder %s110, %s111
      %p122 = scmp.eq.s32.totalorder %s24, 0
      %p123 = por %p121, %p122
      %p124 = scmp.ne.s32.totalorder %s110, %s111
      %p125 = scmp.eq.s32.totalorder %s25, 1
      %p126 = por %p124, %p125
      %p128 = scmp.ne.s32.totalorder %s111, %s127
      %p129 = scmp.eq.s32.totalorder %s25, 0
      %p130 = por %p128, %p129
      %s132 = sadd.s32 %s131, 1
      %p135 = scmp.eq.s32.totalorder %s19, 1
      %p136 = scmp.ne.s32.totalorder %s131, %s133
      %p137 = scmp.eq.s32.totalorder %s19, 0
      %p138 = por %p136, %p137
      %p139 = scmp.ne.s32.totalorder %s131, %s133
      %p140 = scmp.eq.s32.totalorder %s24, 1
      %p141 = por %p139, %p140
      %p142 = scmp.ne.s32.totalorder %s133, %s134
      %p143 = scmp.eq.s32.totalorder %s24, 0
      %p144 = por %p142, %p143
      %p145 = scmp.ne.s32.totalorder %s133, %s134
      %p146 = scmp.eq.s32.totalorder %s25, 1
      %p147 = por %p145, %p146
      %p149 = scmp.ne.s32.totalorder %s134, %s148
      %p150 = scmp.eq.s32.totalorder %s25, 0
      %p151 = por %p149, %p150
      %s152 = ssub.s32 %s19, %s26
      %p153 = scmp.eq.s32.totalorder %s152, 0
      %s155 = sadd.s32 %s154, 1
      %s156 = scalar_select %p153, %s154, %s155
      %p159 = pneg %p153
      %p160 = scmp.eq.s32.totalorder %s19, 1
      %p161 = por %p159, %p160
      %p162 = scmp.ne.s32.totalorder %s154, %s157
      %p163 = scmp.eq.s32.totalorder %s19, 0
      %p164 = por %p162, %p163
      %p165 = scmp.ne.s32.totalorder %s154, %s157
      %p166 = scmp.eq.s32.totalorder %s24, 1
      %p167 = por %p165, %p166
      %p168 = scmp.ne.s32.totalorder %s157, %s158
      %p169 = scmp.eq.s32.totalorder %s24, 0
      %p170 = por %p168, %p169
      %p171 = scmp.ne.s32.totalorder %s157, %s158
      %p172 = scmp.eq.s32.totalorder %s25, 1
      %p173 = por %p171, %p172
      %p175 = scmp.ne.s32.totalorder %s158, %s174
      %p176 = scmp.eq.s32.totalorder %s25, 0
      %p177 = por %p175, %p176
      %s178 = ssub.s32 %s19, %s26
      %p179 = scmp.eq.s32.totalorder %s178, 0
      %s181 = sadd.s32 %s180, 1
      %s182 = scalar_select %p179, %s180, %s181
      %p185 = pneg %p179
      %p186 = scmp.eq.s32.totalorder %s19, 1
      %p187 = por %p185, %p186
      %p188 = scmp.ne.s32.totalorder %s180, %s183
      %p189 = scmp.eq.s32.totalorder %s19, 0
      %p190 = por %p188, %p189
      %p191 = scmp.ne.s32.totalorder %s180, %s183
      %p192 = scmp.eq.s32.totalorder %s24, 1
      %p193 = por %p191, %p192
      %p194 = scmp.ne.s32.totalorder %s183, %s184
      %p195 = scmp.eq.s32.totalorder %s24, 0
      %p196 = por %p194, %p195
      %p197 = scmp.ne.s32.totalorder %s183, %s184
      %p198 = scmp.eq.s32.totalorder %s25, 1
      %p199 = por %p197, %p198
      %p201 = scmp.ne.s32.totalorder %s184, %s200
      %p202 = scmp.eq.s32.totalorder %s25, 0
      %p203 = por %p201, %p202
      %p204 = scmp.le.s32.totalorder 1, %s19
      %p205 = scmp.lt.s32.totalorder %s19, 3
      %p206 = pnand %p204, %p205
      %p207 = pneg %p206
      // Predicated region
      $region9: #{tpu_custom_call.1} parent=5 // pred_check
        _
      $region10: #{tpu_custom_call.1} parent=5 // pred_check_branch
        %209 = sbr.rel (%p206) target = $region12
      $region11: #{tpu_custom_call.1} parent=5 // pred_region
        %s210 = ssub.s32 %s19, 1
        // Predicated region
        $region13: #{tpu_custom_call.1} parent=11 // pred_check
          %p211 = pneg %p144
        $region14: #{tpu_custom_call.1} parent=11 // pred_check_branch
          %213 = sbr.rel (%p211) target = $region16
        $region15: #{tpu_custom_call.1} parent=11 // pred_region
          _
        $region16: #{tpu_custom_call.1} parent=11 // pred_fallthru
          _
      $region12: #{tpu_custom_call.1} parent=5 // pred_fallthru
        _
      %p214 = scmp.lt.s32.totalorder %s19, 2
      // Predicated region
      $region17: #{tpu_custom_call.1} parent=5 // pred_check
        %p215 = pneg %p214
      $region18: #{tpu_custom_call.1} parent=5 // pred_check_branch
        %217 = sbr.rel (%p215) target = $region20
      $region19: #{tpu_custom_call.1} parent=5 // pred_region
        // Predicated region
        $region21: #{tpu_custom_call.1} parent=19 // pred_check
          %p218 = pneg %p39
        $region22: #{tpu_custom_call.1} parent=19 // pred_check_branch
          %220 = sbr.rel (%p218) target = $region24
        $region23: #{tpu_custom_call.1} parent=19 // pred_region
          %p221 = scmp.lt.s32.totalorder %s19, 1
          %s222 = scalar_select %p221, %s19, 1
          %s223 = smul.addr %s222, 18
          %s224 = smul.addr %s223, 4
          %s225 = scalar_lea.vmem %s0, %s224
        $region24: #{tpu_custom_call.1} parent=19 // pred_fallthru
          _
        // Predicated region
        $region25: #{tpu_custom_call.1} parent=19 // pred_check
          %p226 = pneg %p65
        $region26: #{tpu_custom_call.1} parent=19 // pred_check_branch
          %228 = sbr.rel (%p226) target = $region28
        $region27: #{tpu_custom_call.1} parent=19 // pred_region
          %p229 = scmp.lt.s32.totalorder %s19, 1
          %s230 = scalar_select %p229, %s19, 1
          %s231 = smul.addr %s230, 18
          %s232 = smul.addr %s231, 4
          %s233 = scalar_lea.vmem %s1, %s232
        $region28: #{tpu_custom_call.1} parent=19 // pred_fallthru
          _
        // Predicated region
        $region29: #{tpu_custom_call.1} parent=19 // pred_check
          %p234 = pneg %p91
        $region30: #{tpu_custom_call.1} parent=19 // pred_check_branch
          %236 = sbr.rel (%p234) target = $region32
        $region31: #{tpu_custom_call.1} parent=19 // pred_region
          %p237 = scmp.lt.s32.totalorder %s19, 1
          %s238 = scalar_select %p237, %s19, 1
          %s239 = smul.addr %s238, 18
          %s240 = smul.addr %s239, 4
          %s241 = scalar_lea.vmem %s2, %s240
        $region32: #{tpu_custom_call.1} parent=19 // pred_fallthru
          _
        // Predicated region
        $region33: #{tpu_custom_call.1} parent=19 // pred_check
          %p242 = pneg %p117
        $region34: #{tpu_custom_call.1} parent=19 // pred_check_branch
          %244 = sbr.rel (%p242) target = $region36
        $region35: #{tpu_custom_call.1} parent=19 // pred_region
          %p245 = scmp.lt.s32.totalorder %s19, 1
          %s246 = scalar_select %p245, %s19, 1
          %s247 = smul.addr %s246, 18
          %s248 = smul.addr %s247, 4
          %s249 = scalar_lea.vmem %s3, %s248
        $region36: #{tpu_custom_call.1} parent=19 // pred_fallthru
          _
      $region20: #{tpu_custom_call.1} parent=5 // pred_fallthru
        _
      %p250 = scmp.le.s32.totalorder 1, %s19
      %p251 = scmp.lt.s32.totalorder %s19, 3
      %p252 = pnand %p250, %p251
      %p253 = pneg %p252
      // Predicated region
      $region37: #{tpu_custom_call.1} parent=5 // pred_check
        _
      $region38: #{tpu_custom_call.1} parent=5 // pred_check_branch
        %255 = sbr.rel (%p252) target = $region40
      $region39: #{tpu_custom_call.1} parent=5 // pred_region
        %s256 = ssub.s32 %s19, 1
        %p257 = scmp.lt.s32.totalorder %s24, 1
        %s258 = scalar_select %p257, %s24, 1
        %s259 = smul.addr %s258, 18
        %s260 = smul.addr %s259, 4
        %s261 = scalar_lea.vmem %s0, %s260
        %p262 = pneg %p45
        %p263 = pneg %p42
        %p264 = scmp.lt.s32.totalorder %s24, 1
        %s265 = scalar_select %p264, %s24, 1
        %s266 = smul.addr %s265, 18
        %s267 = smul.addr %s266, 4
        %s268 = scalar_lea.vmem %s1, %s267
        %p269 = pneg %p71
        %p270 = pneg %p68
        %p271 = scmp.lt.s32.totalorder %s24, 1
        %s272 = scalar_select %p271, %s24, 1
        %s273 = smul.addr %s272, 18
        %s274 = smul.addr %s273, 4
        %s275 = scalar_lea.vmem %s2, %s274
        %p276 = pneg %p97
        %p277 = pneg %p94
        %p278 = scmp.lt.s32.totalorder %s24, 1
        %s279 = scalar_select %p278, %s24, 1
        %s280 = smul.addr %s279, 18
        %s281 = smul.addr %s280, 4
        %s282 = scalar_lea.vmem %s3, %s281
        %p283 = pneg %p123
        %p284 = pneg %p120
        %p285 = pneg %p144
        %p286 = pneg %p141
        %p287 = pneg %p170
        %p288 = pneg %p167
        %s289 = sand.u32 %s157, 1
        %s290 = scalar_lea.sflag [#allocation4], %s289
        %s291 = sand.u32 %s157, 1
        %s292 = smul.addr %s291, 32
        %s293 = scalar_lea.vmem [#allocation3], %s292
        %p294 = pneg %p196
        %p295 = pneg %p193
        %s296 = sand.u32 %s183, 1
        %s297 = scalar_lea.sflag [#allocation6], %s296
        %s298 = sand.u32 %s183, 1
        %s299 = smul.addr %s298, 2
        %s300 = scalar_lea.vmem [#allocation5], %s299
        %p301 = scmp.lt.s32.totalorder %s24, 1
        %s302 = scalar_select %p301, %s24, 1
        %s303 = smul.addr %s302, 18
        %s304 = smul.addr %s303, 4
        %s305 = scalar_lea.vmem %s0, %s304
        %p306 = scmp.lt.s32.totalorder %s24, 1
        %s307 = scalar_select %p306, %s24, 1
        %s308 = smul.addr %s307, 18
        %s309 = smul.addr %s308, 4
        %s310 = scalar_lea.vmem %s1, %s309
        %p311 = scmp.lt.s32.totalorder %s24, 1
        %s312 = scalar_select %p311, %s24, 1
        %s313 = smul.addr %s312, 18
        %s314 = smul.addr %s313, 4
        %s315 = scalar_lea.vmem %s2, %s314
        %p316 = scmp.lt.s32.totalorder %s24, 1
        %s317 = scalar_select %p316, %s24, 1
        %s318 = smul.addr %s317, 18
        %s319 = smul.addr %s318, 4
        %s320 = scalar_lea.vmem %s3, %s319
        %v322 = vld [vmem:[%s305] sm:$0xf]
        %v323 = vld [vmem:[%s305 + $0x8] sm:$0xf]
        %v324 = vld [vmem:[%s305 + $0x10] sm:$0xf]
        %v325 = vld [vmem:[%s305 + $0x18] sm:$0xf]
        %v326 = vld [vmem:[%s305 + $0x20] sm:$0xf]
        %v327 = vld [vmem:[%s305 + $0x28] sm:$0xf]
        %v328 = vld [vmem:[%s305 + $0x30] sm:$0xf]
        %v329 = vld [vmem:[%s305 + $0x38] sm:$0xf]
        %v330 = vld [vmem:[%s4] sm:$0xf]
        %v331 = vld [vmem:[%s4 + $0x4] sm:$0xf]
        %v332 = vld [vmem:[%s4 + $0x8] sm:$0xf]
        %v333 = vld [vmem:[%s4 + $0xc] sm:$0xf]
        %v334 = vld [vmem:[%s4 + $0x10] sm:$0xf]
        %v335 = vld [vmem:[%s4 + $0x14] sm:$0xf]
        %v336 = vld [vmem:[%s4 + $0x18] sm:$0xf]
        %v337 = vld [vmem:[%s4 + $0x1c] sm:$0xf]
        %v338 = vld [vmem:[%s4 + $0x20] sm:$0xf]
        %v339 = vld [vmem:[%s4 + $0x24] sm:$0xf]
        %v340 = vld [vmem:[%s4 + $0x28] sm:$0xf]
        %v341 = vld [vmem:[%s4 + $0x2c] sm:$0xf]
        %v342 = vld [vmem:[%s4 + $0x30] sm:$0xf]
        %v343 = vld [vmem:[%s4 + $0x34] sm:$0xf]
        %v344 = vld [vmem:[%s4 + $0x38] sm:$0xf]
        %v345 = vld [vmem:[%s4 + $0x3c] sm:$0xf]
        %v354 = vunpack.c.l.b16 %v322
        %v355 = vunpack.c.l.b16 %v323
        %v356 = vunpack.c.l.b16 %v324
        %v357 = vunpack.c.l.b16 %v325
        %v358 = vunpack.c.l.b16 %v326
        %v359 = vunpack.c.l.b16 %v327
        %v360 = vunpack.c.l.b16 %v328
        %v361 = vunpack.c.l.b16 %v329
        %v362 = vpack.c.b16 %v355, %v354
        %v363 = vpack.c.b16 %v357, %v356
        %v364 = vpack.c.b16 %v359, %v358
        %v365 = vpack.c.b16 %v361, %v360
        %v386 = vunpack.c.l.b16 %v330
        %v387 = vunpack.c.l.b16 %v331
        %v388 = vunpack.c.l.b16 %v332
        %v389 = vunpack.c.l.b16 %v333
        %v390 = vunpack.c.l.b16 %v334
        %v391 = vunpack.c.l.b16 %v335
        %v392 = vunpack.c.l.b16 %v336
        %v393 = vunpack.c.l.b16 %v337
        %v394 = vunpack.c.l.b16 %v338
        %v395 = vunpack.c.l.b16 %v339
        %v396 = vunpack.c.l.b16 %v340
        %v397 = vunpack.c.l.b16 %v341
        %v398 = vunpack.c.l.b16 %v342
        %v399 = vunpack.c.l.b16 %v343
        %v400 = vunpack.c.l.b16 %v344
        %v401 = vunpack.c.l.b16 %v345
        %v402 = vpack.c.b16 %v387, %v386
        %v403 = vpack.c.b16 %v389, %v388
        %v404 = vpack.c.b16 %v391, %v390
        %v405 = vpack.c.b16 %v393, %v392
        %v406 = vpack.c.b16 %v395, %v394
        %v407 = vpack.c.b16 %v397, %v396
        %v408 = vpack.c.b16 %v399, %v398
        %v409 = vpack.c.b16 %v401, %v400
        %418 = vmatprep.subr.bf16.mxu0 0
        %419 = vmatpush1.bf16.msra.mxu0 %v402
        %420 = vmatprep.subr.bf16.mxu0 0
        %421 = vmatpush1.bf16.msra.mxu0 %v403
        %422 = vmatprep.subr.bf16.mxu0 0
        %423 = vmatpush1.bf16.msra.mxu0 %v404
        %424 = vmatprep.subr.bf16.mxu0 0
        %425 = vmatpush1.bf16.msra.mxu0 %v405
        %426 = vmatprep.subr.bf16.mxu0 0
        %427 = vmatpush1.bf16.msra.mxu0 %v406
        %428 = vmatprep.subr.bf16.mxu0 0
        %429 = vmatpush1.bf16.msra.mxu0 %v407
        %430 = vmatprep.subr.bf16.mxu0 0
        %431 = vmatpush1.bf16.msra.mxu0 %v408
        %432 = vmatprep.subr.bf16.mxu0 0
        %433 = vmatpush1.bf16.msra.mxu0 %v409
        %434 = vmatprep.subr.bf16.mxu0 0
        %435 = vmatpush1.bf16.msra.mxu0 0
        %436 = vmatprep.subr.bf16.mxu0 0
        %437 = vmatpush1.bf16.msra.mxu0 0
        %438 = vmatprep.subr.bf16.mxu0 0
        %439 = vmatpush1.bf16.msra.mxu0 0
        %440 = vmatprep.subr.bf16.mxu0 0
        %441 = vmatpush1.bf16.msra.mxu0 0
        %442 = vmatprep.subr.bf16.mxu0 0
        %443 = vmatpush1.bf16.msra.mxu0 0
        %444 = vmatprep.subr.bf16.mxu0 0
        %445 = vmatpush1.bf16.msra.mxu0 0
        %446 = vmatprep.subr.bf16.mxu0 0
        %447 = vmatpush1.bf16.msra.mxu0 0
        %448 = vmatprep.subr.bf16.mxu0 0
        %449 = vmatpush1.bf16.msra.mxu0 0
        %450 = vmatprep.mubr.bf16.mxu0 0
        %451 = vmatmul.mubr.bf16.gmra.mrb[0].mxu0 %v362
        %v452 = vpop.f32.mrb[0].mxu0
        %v453 = vadd.f32 0.0, %v452
        %v454 = vpop.f32.mrb[0].mxu0
        %v455 = vpop.f32.mrb[0].mxu0
        %v456 = vadd.f32 0.0, %v455
        %v457 = vpop.f32.mrb[0].mxu0
        %458 = vmatprep.mubr.bf16.mxu0 0
        %459 = vmatmul.mubr.bf16.gmra.mrb[0].mxu0 %v363
        %v460 = vpop.f32.mrb[0].mxu0
        %v461 = vadd.f32 0.0, %v460
        %v462 = vpop.f32.mrb[0].mxu0
        %v463 = vpop.f32.mrb[0].mxu0
        %v464 = vadd.f32 0.0, %v463
        %v465 = vpop.f32.mrb[0].mxu0
        %466 = vmatprep.mubr.bf16.mxu0 0
        %467 = vmatmul.mubr.bf16.gmra.mrb[0].mxu0 %v364
        %v468 = vpop.f32.mrb[0].mxu0
        %v469 = vadd.f32 0.0, %v468
        %v470 = vpop.f32.mrb[0].mxu0
        %v471 = vpop.f32.mrb[0].mxu0
        %v472 = vadd.f32 0.0, %v471
        %v473 = vpop.f32.mrb[0].mxu0
        %474 = vmatprep.mubr.bf16.mxu0 0
        %475 = vmatmul.mubr.bf16.gmra.mrb[0].mxu0 %v365
        %v476 = vpop.f32.mrb[0].mxu0
        %v477 = vadd.f32 0.0, %v476
        %v478 = vpop.f32.mrb[0].mxu0
        %v479 = vpop.f32.mrb[0].mxu0
        %v480 = vadd.f32 0.0, %v479
        %v481 = vpop.f32.mrb[0].mxu0
        %482 = vdwg.mxu0
        %483 = vst [vmem:[#allocation2] sm:$0xff] %v453
        %484 = vst [vmem:[#allocation2 + $0x8] sm:$0xff] %v456
        %485 = vst [vmem:[#allocation2 + $0x10] sm:$0xff] %v461
        %486 = vst [vmem:[#allocation2 + $0x18] sm:$0xff] %v464
        %487 = vst [vmem:[#allocation2 + $0x20] sm:$0xff] %v469
        %488 = vst [vmem:[#allocation2 + $0x28] sm:$0xff] %v472
        %489 = vst [vmem:[#allocation2 + $0x30] sm:$0xff] %v477
        %490 = vst [vmem:[#allocation2 + $0x38] sm:$0xff] %v480
        %v491 = vld [vmem:[%s310] sm:$0xf]
        %v492 = vld [vmem:[%s310 + $0x8] sm:$0xf]
        %v493 = vld [vmem:[%s310 + $0x10] sm:$0xf]
        %v494 = vld [vmem:[%s310 + $0x18] sm:$0xf]
        %v495 = vld [vmem:[%s310 + $0x20] sm:$0xf]
        %v496 = vld [vmem:[%s310 + $0x28] sm:$0xf]
        %v497 = vld [vmem:[%s310 + $0x30] sm:$0xf]
        %v498 = vld [vmem:[%s310 + $0x38] sm:$0xf]
        %s499 = scalar_lea.vmem %s4, 64
        %v500 = vld [vmem:[%s499] sm:$0xf]
        %v501 = vld [vmem:[%s499 + $0x4] sm:$0xf]
        %v502 = vld [vmem:[%s499 + $0x8] sm:$0xf]
        %v503 = vld [vmem:[%s499 + $0xc] sm:$0xf]
        %v504 = vld [vmem:[%s499 + $0x10] sm:$0xf]
        %v505 = vld [vmem:[%s499 + $0x14] sm:$0xf]
        %v506 = vld [vmem:[%s499 + $0x18] sm:$0xf]
        %v507 = vld [vmem:[%s499 + $0x1c] sm:$0xf]
        %v508 = vld [vmem:[%s499 + $0x20] sm:$0xf]
        %v509 = vld [vmem:[%s499 + $0x24] sm:$0xf]
        %v510 = vld [vmem:[%s499 + $0x28] sm:$0xf]
        %v511 = vld [vmem:[%s499 + $0x2c] sm:$0xf]
        %v512 = vld [vmem:[%s499 + $0x30] sm:$0xf]
        %v513 = vld [vmem:[%s499 + $0x34] sm:$0xf]
        %v514 = vld [vmem:[%s499 + $0x38] sm:$0xf]
        %v515 = vld [vmem:[%s499 + $0x3c] sm:$0xf]
        %v524 = vunpack.c.l.b16 %v491
        %v525 = vunpack.c.l.b16 %v492
        %v526 = vunpack.c.l.b16 %v493
        %v527 = vunpack.c.l.b16 %v494
        %v528 = vunpack.c.l.b16 %v495
        %v529 = vunpack.c.l.b16 %v496
        %v530 = vunpack.c.l.b16 %v497
        %v531 = vunpack.c.l.b16 %v498
        %v532 = vpack.c.b16 %v525, %v524
        %v533 = vpack.c.b16 %v527, %v526
        %v534 = vpack.c.b16 %v529, %v528
        %v535 = vpack.c.b16 %v531, %v530
        %v556 = vunpack.c.l.b16 %v500
        %v557 = vunpack.c.l.b16 %v501
        %v558 = vunpack.c.l.b16 %v502
        %v559 = vunpack.c.l.b16 %v503
        %v560 = vunpack.c.l.b16 %v504
        %v561 = vunpack.c.l.b16 %v505
        %v562 = vunpack.c.l.b16 %v506
        %v563 = vunpack.c.l.b16 %v507
        %v564 = vunpack.c.l.b16 %v508
        %v565 = vunpack.c.l.b16 %v509
        %v566 = vunpack.c.l.b16 %v510
        %v567 = vunpack.c.l.b16 %v511
        %v568 = vunpack.c.l.b16 %v512
        %v569 = vunpack.c.l.b16 %v513
        %v570 = vunpack.c.l.b16 %v514
        %v571 = vunpack.c.l.b16 %v515
        %v572 = vpack.c.b16 %v557, %v556
        %v573 = vpack.c.b16 %v559, %v558
        %v574 = vpack.c.b16 %v561, %v560
        %v575 = vpack.c.b16 %v563, %v562
        %v576 = vpack.c.b16 %v565, %v564
        %v577 = vpack.c.b16 %v567, %v566
        %v578 = vpack.c.b16 %v569, %v568
        %v579 = vpack.c.b16 %v571, %v570
        %588 = vmatprep.subr.bf16.mxu0 0
        %589 = vmatpush1.bf16.msra.mxu0 %v572
        %590 = vmatprep.subr.bf16.mxu0 0
        %591 = vmatpush1.bf16.msra.mxu0 %v573
        %592 = vmatprep.subr.bf16.mxu0 0
        %593 = vmatpush1.bf16.msra.mxu0 %v574
        %594 = vmatprep.subr.bf16.mxu0 0
        %595 = vmatpush1.bf16.msra.mxu0 %v575
        %596 = vmatprep.subr.bf16.mxu0 0
        %597 = vmatpush1.bf16.msra.mxu0 %v576
        %598 = vmatprep.subr.bf16.mxu0 0
        %599 = vmatpush1.bf16.msra.mxu0 %v577
        %600 = vmatprep.subr.bf16.mxu0 0
        %601 = vmatpush1.bf16.msra.mxu0 %v578
        %602 = vmatprep.subr.bf16.mxu0 0
        %603 = vmatpush1.bf16.msra.mxu0 %v579
        %604 = vmatprep.subr.bf16.mxu0 0
        %605 = vmatpush1.bf16.msra.mxu0 0
        %606 = vmatprep.subr.bf16.mxu0 0
        %607 = vmatpush1.bf16.msra.mxu0 0
        %608 = vmatprep.subr.bf16.mxu0 0
        %609 = vmatpush1.bf16.msra.mxu0 0
        %610 = vmatprep.subr.bf16.mxu0 0
        %611 = vmatpush1.bf16.msra.mxu0 0
        %612 = vmatprep.subr.bf16.mxu0 0
        %613 = vmatpush1.bf16.msra.mxu0 0
        %614 = vmatprep.subr.bf16.mxu0 0
        %615 = vmatpush1.bf16.msra.mxu0 0
        %616 = vmatprep.subr.bf16.mxu0 0
        %617 = vmatpush1.bf16.msra.mxu0 0
        %618 = vmatprep.subr.bf16.mxu0 0
        %619 = vmatpush1.bf16.msra.mxu0 0
        %620 = vmatprep.mubr.bf16.mxu0 0
        %621 = vmatmul.mubr.bf16.gmra.mrb[0].mxu0 %v532
        %v622 = vpop.f32.mrb[0].mxu0
        %v623 = vadd.f32 0.0, %v622
        %v624 = vpop.f32.mrb[0].mxu0
        %v625 = vpop.f32.mrb[0].mxu0
        %v626 = vadd.f32 0.0, %v625
        %v627 = vpop.f32.mrb[0].mxu0
        %628 = vmatprep.mubr.bf16.mxu0 0
        %629 = vmatmul.mubr.bf16.gmra.mrb[0].mxu0 %v533
        %v630 = vpop.f32.mrb[0].mxu0
        %v631 = vadd.f32 0.0, %v630
        %v632 = vpop.f32.mrb[0].mxu0
        %v633 = vpop.f32.mrb[0].mxu0
        %v634 = vadd.f32 0.0, %v633
        %v635 = vpop.f32.mrb[0].mxu0
        %636 = vmatprep.mubr.bf16.mxu0 0
        %637 = vmatmul.mubr.bf16.gmra.mrb[0].mxu0 %v534
        %v638 = vpop.f32.mrb[0].mxu0
        %v639 = vadd.f32 0.0, %v638
        %v640 = vpop.f32.mrb[0].mxu0
        %v641 = vpop.f32.mrb[0].mxu0
        %v642 = vadd.f32 0.0, %v641
        %v643 = vpop.f32.mrb[0].mxu0
        %644 = vmatprep.mubr.bf16.mxu0 0
        %645 = vmatmul.mubr.bf16.gmra.mrb[0].mxu0 %v535
        %v646 = vpop.f32.mrb[0].mxu0
        %v647 = vadd.f32 0.0, %v646
        %v648 = vpop.f32.mrb[0].mxu0
        %v649 = vpop.f32.mrb[0].mxu0
        %v650 = vadd.f32 0.0, %v649
        %v651 = vpop.f32.mrb[0].mxu0
        %652 = vdwg.mxu0
        %v653 = vld [vmem:[#allocation2] sm:$0xff]
        %v654 = vld [vmem:[#allocation2 + $0x8] sm:$0xff]
        %v655 = vld [vmem:[#allocation2 + $0x10] sm:$0xff]
        %v656 = vld [vmem:[#allocation2 + $0x18] sm:$0xff]
        %v657 = vld [vmem:[#allocation2 + $0x20] sm:$0xff]
        %v658 = vld [vmem:[#allocation2 + $0x28] sm:$0xff]
        %v659 = vld [vmem:[#allocation2 + $0x30] sm:$0xff]
        %v660 = vld [vmem:[#allocation2 + $0x38] sm:$0xff]
        %v661 = vadd.f32 %v653, %v623
        %v662 = vadd.f32 %v654, %v626
        %v663 = vadd.f32 %v655, %v631
        %v664 = vadd.f32 %v656, %v634
        %v665 = vadd.f32 %v657, %v639
        %v666 = vadd.f32 %v658, %v642
        %v667 = vadd.f32 %v659, %v647
        %v668 = vadd.f32 %v660, %v650
        %669 = vst [vmem:[#allocation2] sm:$0xff] %v661
        %670 = vst [vmem:[#allocation2 + $0x8] sm:$0xff] %v662
        %671 = vst [vmem:[#allocation2 + $0x10] sm:$0xff] %v663
        %672 = vst [vmem:[#allocation2 + $0x18] sm:$0xff] %v664
        %673 = vst [vmem:[#allocation2 + $0x20] sm:$0xff] %v665
        %674 = vst [vmem:[#allocation2 + $0x28] sm:$0xff] %v666
        %675 = vst [vmem:[#allocation2 + $0x30] sm:$0xff] %v667
        %676 = vst [vmem:[#allocation2 + $0x38] sm:$0xff] %v668
        %v677 = vld [vmem:[%s305] sm:$0xf]
        %v678 = vld [vmem:[%s305 + $0x4] sm:$0x1]
        %v679 = vld [vmem:[%s305 + $0x8] sm:$0xf]
        %v680 = vld [vmem:[%s305 + $0xc] sm:$0x1]
        %v681 = vld [vmem:[%s305 + $0x10] sm:$0xf]
        %v682 = vld [vmem:[%s305 + $0x14] sm:$0x1]
        %v683 = vld [vmem:[%s305 + $0x18] sm:$0xf]
        %v684 = vld [vmem:[%s305 + $0x1c] sm:$0x1]
        %v685 = vld [vmem:[%s305 + $0x20] sm:$0xf]
        %v686 = vld [vmem:[%s305 + $0x24] sm:$0x1]
        %v687 = vld [vmem:[%s305 + $0x28] sm:$0xf]
        %v688 = vld [vmem:[%s305 + $0x2c] sm:$0x1]
        %v689 = vld [vmem:[%s305 + $0x30] sm:$0xf]
        %v690 = vld [vmem:[%s305 + $0x34] sm:$0x1]
        %v691 = vld [vmem:[%s305 + $0x38] sm:$0xf]
        %v692 = vld [vmem:[%s305 + $0x3c] sm:$0x1]
        %vm693 = vsmask.f32 3328
        %vm694 = vsmask.f32 7440
        %vm695 = vmor %vm693, %vm694
        %v697 = vshrl.u32 %v677, 16
        %v699 = vrot.slane %v697, 4
        %v700 = vshll.u32 %v677, 16
        %v702 = vrot.slane %v700, 5
        %v703 = vor.u32 %v699, %v702
        %v704 = vrot.slane %v703, 4
        %v706 = vshll.u32 %v678, 16
        %v708 = vrot.slane %v706, 5
        %v709 = vsel %vm695, %v704, %v708
        %v711 = vshrl.u32 %v679, 16
        %v713 = vrot.slane %v711, 4
        %v714 = vshll.u32 %v679, 16
        %v716 = vrot.slane %v714, 5
        %v717 = vor.u32 %v713, %v716
        %v718 = vrot.slane %v717, 4
        %v720 = vshll.u32 %v680, 16
        %v722 = vrot.slane %v720, 5
        %v723 = vsel %vm695, %v718, %v722
        %v725 = vshrl.u32 %v681, 16
        %v727 = vrot.slane %v725, 4
        %v728 = vshll.u32 %v681, 16
        %v730 = vrot.slane %v728, 5
        %v731 = vor.u32 %v727, %v730
        %v732 = vrot.slane %v731, 4
        %v734 = vshll.u32 %v682, 16
        %v736 = vrot.slane %v734, 5
        %v737 = vsel %vm695, %v732, %v736
        %v739 = vshrl.u32 %v683, 16
        %v741 = vrot.slane %v739, 4
        %v742 = vshll.u32 %v683, 16
        %v744 = vrot.slane %v742, 5
        %v745 = vor.u32 %v741, %v744
        %v746 = vrot.slane %v745, 4
        %v748 = vshll.u32 %v684, 16
        %v750 = vrot.slane %v748, 5
        %v751 = vsel %vm695, %v746, %v750
        %v753 = vshrl.u32 %v685, 16
        %v755 = vrot.slane %v753, 4
        %v756 = vshll.u32 %v685, 16
        %v758 = vrot.slane %v756, 5
        %v759 = vor.u32 %v755, %v758
        %v760 = vrot.slane %v759, 4
        %v762 = vshll.u32 %v686, 16
        %v764 = vrot.slane %v762, 5
        %v765 = vsel %vm695, %v760, %v764
        %v767 = vshrl.u32 %v687, 16
        %v769 = vrot.slane %v767, 4
        %v770 = vshll.u32 %v687, 16
        %v772 = vrot.slane %v770, 5
        %v773 = vor.u32 %v769, %v772
        %v774 = vrot.slane %v773, 4
        %v776 = vshll.u32 %v688, 16
        %v778 = vrot.slane %v776, 5
        %v779 = vsel %vm695, %v774, %v778
        %v781 = vshrl.u32 %v689, 16
        %v783 = vrot.slane %v781, 4
        %v784 = vshll.u32 %v689, 16
        %v786 = vrot.slane %v784, 5
        %v787 = vor.u32 %v783, %v786
        %v788 = vrot.slane %v787, 4
        %v790 = vshll.u32 %v690, 16
        %v792 = vrot.slane %v790, 5
        %v793 = vsel %vm695, %v788, %v792
        %v795 = vshrl.u32 %v691, 16
        %v797 = vrot.slane %v795, 4
        %v798 = vshll.u32 %v691, 16
        %v800 = vrot.slane %v798, 5
        %v801 = vor.u32 %v797, %v800
        %v802 = vrot.slane %v801, 4
        %v804 = vshll.u32 %v692, 16
        %v806 = vrot.slane %v804, 5
        %v807 = vsel %vm695, %v802, %v806
        %s808 = scalar_lea.vmem %s4, 128
        %v809 = vld [vmem:[%s808] sm:$0xf]
        %v810 = vld [vmem:[%s808 + $0x4] sm:$0xf]
        %v811 = vld [vmem:[%s808 + $0x8] sm:$0xf]
        %v812 = vld [vmem:[%s808 + $0xc] sm:$0xf]
        %v813 = vld [vmem:[%s808 + $0x10] sm:$0xf]
        %v814 = vld [vmem:[%s808 + $0x14] sm:$0xf]
        %v815 = vld [vmem:[%s808 + $0x18] sm:$0xf]
        %v816 = vld [vmem:[%s808 + $0x1c] sm:$0xf]
        %v817 = vld [vmem:[%s808 + $0x20] sm:$0xf]
        %v818 = vld [vmem:[%s808 + $0x24] sm:$0xf]
        %v819 = vld [vmem:[%s808 + $0x28] sm:$0xf]
        %v820 = vld [vmem:[%s808 + $0x2c] sm:$0xf]
        %v821 = vld [vmem:[%s808 + $0x30] sm:$0xf]
        %v822 = vld [vmem:[%s808 + $0x34] sm:$0xf]
        %v823 = vld [vmem:[%s808 + $0x38] sm:$0xf]
        %v824 = vld [vmem:[%s808 + $0x3c] sm:$0xf]
        %v825 = vunpack.c.l.b16 %v709
        %v826 = vunpack.c.l.b16 %v723
        %v827 = vunpack.c.l.b16 %v737
        %v828 = vunpack.c.l.b16 %v751
        %v829 = vunpack.c.l.b16 %v765
        %v830 = vunpack.c.l.b16 %v779
        %v831 = vunpack.c.l.b16 %v793
        %v832 = vunpack.c.l.b16 %v807
        %v833 = vpack.c.b16 %v826, %v825
        %v834 = vpack.c.b16 %v828, %v827
        %v835 = vpack.c.b16 %v830, %v829
        %v836 = vpack.c.b16 %v832, %v831
        %v857 = vunpack.c.l.b16 %v809
        %v858 = vunpack.c.l.b16 %v810
        %v859 = vunpack.c.l.b16 %v811
        %v860 = vunpack.c.l.b16 %v812
        %v861 = vunpack.c.l.b16 %v813
        %v862 = vunpack.c.l.b16 %v814
        %v863 = vunpack.c.l.b16 %v815
        %v864 = vunpack.c.l.b16 %v816
        %v865 = vunpack.c.l.b16 %v817
        %v866 = vunpack.c.l.b16 %v818
        %v867 = vunpack.c.l.b16 %v819
        %v868 = vunpack.c.l.b16 %v820
        %v869 = vunpack.c.l.b16 %v821
        %v870 = vunpack.c.l.b16 %v822
        %v871 = vunpack.c.l.b16 %v823
        %v872 = vunpack.c.l.b16 %v824
        %v873 = vpack.c.b16 %v858, %v857
        %v874 = vpack.c.b16 %v860, %v859
        %v875 = vpack.c.b16 %v862, %v861
        %v876 = vpack.c.b16 %v864, %v863
        %v877 = vpack.c.b16 %v866, %v865
        %v878 = vpack.c.b16 %v868, %v867
        %v879 = vpack.c.b16 %v870, %v869
        %v880 = vpack.c.b16 %v872, %v871
        %889 = vmatprep.subr.bf16.mxu0 0
        %890 = vmatpush1.bf16.msra.mxu0 %v873
        %891 = vmatprep.subr.bf16.mxu0 0
        %892 = vmatpush1.bf16.msra.mxu0 %v874
        %893 = vmatprep.subr.bf16.mxu0 0
        %894 = vmatpush1.bf16.msra.mxu0 %v875
        %895 = vmatprep.subr.bf16.mxu0 0
        %896 = vmatpush1.bf16.msra.mxu0 %v876
        %897 = vmatprep.subr.bf16.mxu0 0
        %898 = vmatpush1.bf16.msra.mxu0 %v877
        %899 = vmatprep.subr.bf16.mxu0 0
        %900 = vmatpush1.bf16.msra.mxu0 %v878
        %901 = vmatprep.subr.bf16.mxu0 0
        %902 = vmatpush1.bf16.msra.mxu0 %v879
        %903 = vmatprep.subr.bf16.mxu0 0
        %904 = vmatpush1.bf16.msra.mxu0 %v880
        %905 = vmatprep.subr.bf16.mxu0 0
        %906 = vmatpush1.bf16.msra.mxu0 0
        %907 = vmatprep.subr.bf16.mxu0 0
        %908 = vmatpush1.bf16.msra.mxu0 0
        %909 = vmatprep.subr.bf16.mxu0 0
        %910 = vmatpush1.bf16.msra.mxu0 0
        %911 = vmatprep.subr.bf16.mxu0 0
        %912 = vmatpush1.bf16.msra.mxu0 0
        %913 = vmatprep.subr.bf16.mxu0 0
        %914 = vmatpush1.bf16.msra.mxu0 0
        %915 = vmatprep.subr.bf16.mxu0 0
        %916 = vmatpush1.bf16.msra.mxu0 0
        %917 = vmatprep.subr.bf16.mxu0 0
        %918 = vmatpush1.bf16.msra.mxu0 0
        %919 = vmatprep.subr.bf16.mxu0 0
        %920 = vmatpush1.bf16.msra.mxu0 0
        %921 = vmatprep.mubr.bf16.mxu0 0
        %922 = vmatmul.mubr.bf16.gmra.mrb[0].mxu0 %v833
        %v923 = vpop.f32.mrb[0].mxu0
        %v924 = vadd.f32 0.0, %v923
        %v925 = vpop.f32.mrb[0].mxu0
        %v926 = vpop.f32.mrb[0].mxu0
        %v927 = vadd.f32 0.0, %v926
        %v928 = vpop.f32.mrb[0].mxu0
        %929 = vmatprep.mubr.bf16.mxu0 0
        %930 = vmatmul.mubr.bf16.gmra.mrb[0].mxu0 %v834
        %v931 = vpop.f32.mrb[0].mxu0
        %v932 = vadd.f32 0.0, %v931
        %v933 = vpop.f32.mrb[0].mxu0
        %v934 = vpop.f32.mrb[0].mxu0
        %v935 = vadd.f32 0.0, %v934
        %v936 = vpop.f32.mrb[0].mxu0
        %937 = vmatprep.mubr.bf16.mxu0 0
        %938 = vmatmul.mubr.bf16.gmra.mrb[0].mxu0 %v835
        %v939 = vpop.f32.mrb[0].mxu0
        %v940 = vadd.f32 0.0, %v939
        %v941 = vpop.f32.mrb[0].mxu0
        %v942 = vpop.f32.mrb[0].mxu0
        %v943 = vadd.f32 0.0, %v942
        %v944 = vpop.f32.mrb[0].mxu0
        %945 = vmatprep.mubr.bf16.mxu0 0
        %946 = vmatmul.mubr.bf16.gmra.mrb[0].mxu0 %v836
        %v947 = vpop.f32.mrb[0].mxu0
        %v948 = vadd.f32 0.0, %v947
        %v949 = vpop.f32.mrb[0].mxu0
        %v950 = vpop.f32.mrb[0].mxu0
        %v951 = vadd.f32 0.0, %v950
        %v952 = vpop.f32.mrb[0].mxu0
        %953 = vdwg.mxu0
        %v954 = vld [vmem:[#allocation2] sm:$0xff]
        %v955 = vld [vmem:[#allocation2 + $0x8] sm:$0xff]
        %v956 = vld [vmem:[#allocation2 + $0x10] sm:$0xff]
        %v957 = vld [vmem:[#allocation2 + $0x18] sm:$0xff]
        %v958 = vld [vmem:[#allocation2 + $0x20] sm:$0xff]
        %v959 = vld [vmem:[#allocation2 + $0x28] sm:$0xff]
        %v960 = vld [vmem:[#allocation2 + $0x30] sm:$0xff]
        %v961 = vld [vmem:[#allocation2 + $0x38] sm:$0xff]
        %v962 = vadd.f32 %v954, %v924
        %v963 = vadd.f32 %v955, %v927
        %v964 = vadd.f32 %v956, %v932
        %v965 = vadd.f32 %v957, %v935
        %v966 = vadd.f32 %v958, %v940
        %v967 = vadd.f32 %v959, %v943
        %v968 = vadd.f32 %v960, %v948
        %v969 = vadd.f32 %v961, %v951
        %970 = vst [vmem:[#allocation2] sm:$0xff] %v962
        %971 = vst [vmem:[#allocation2 + $0x8] sm:$0xff] %v963
        %972 = vst [vmem:[#allocation2 + $0x10] sm:$0xff] %v964
        %973 = vst [vmem:[#allocation2 + $0x18] sm:$0xff] %v965
        %974 = vst [vmem:[#allocation2 + $0x20] sm:$0xff] %v966
        %975 = vst [vmem:[#allocation2 + $0x28] sm:$0xff] %v967
        %976 = vst [vmem:[#allocation2 + $0x30] sm:$0xff] %v968
        %977 = vst [vmem:[#allocation2 + $0x38] sm:$0xff] %v969
        %v978 = vld [vmem:[%s315] sm:$0xf]
        %v979 = vld [vmem:[%s315 + $0x8] sm:$0xf]
        %v980 = vld [vmem:[%s315 + $0x10] sm:$0xf]
        %v981 = vld [vmem:[%s315 + $0x18] sm:$0xf]
        %v982 = vld [vmem:[%s315 + $0x20] sm:$0xf]
        %v983 = vld [vmem:[%s315 + $0x28] sm:$0xf]
        %v984 = vld [vmem:[%s315 + $0x30] sm:$0xf]
        %v985 = vld [vmem:[%s315 + $0x38] sm:$0xf]
        %s986 = scalar_lea.vmem %s4, 192
        %v987 = vld [vmem:[%s986] sm:$0xf]
        %v988 = vld [vmem:[%s986 + $0x4] sm:$0xf]
        %v989 = vld [vmem:[%s986 + $0x8] sm:$0xf]
        %v990 = vld [vmem:[%s986 + $0xc] sm:$0xf]
        %v991 = vld [vmem:[%s986 + $0x10] sm:$0xf]
        %v992 = vld [vmem:[%s986 + $0x14] sm:$0xf]
        %v993 = vld [vmem:[%s986 + $0x18] sm:$0xf]
        %v994 = vld [vmem:[%s986 + $0x1c] sm:$0xf]
        %v995 = vld [vmem:[%s986 + $0x20] sm:$0xf]
        %v996 = vld [vmem:[%s986 + $0x24] sm:$0xf]
        %v997 = vld [vmem:[%s986 + $0x28] sm:$0xf]
        %v998 = vld [vmem:[%s986 + $0x2c] sm:$0xf]
        %v999 = vld [vmem:[%s986 + $0x30] sm:$0xf]
        %v1000 = vld [vmem:[%s986 + $0x34] sm:$0xf]
        %v1001 = vld [vmem:[%s986 + $0x38] sm:$0xf]
        %v1002 = vld [vmem:[%s986 + $0x3c] sm:$0xf]
        %v1011 = vunpack.c.l.b16 %v978
        %v1012 = vunpack.c.l.b16 %v979
        %v1013 = vunpack.c.l.b16 %v980
        %v1014 = vunpack.c.l.b16 %v981
        %v1015 = vunpack.c.l.b16 %v982
        %v1016 = vunpack.c.l.b16 %v983
        %v1017 = vunpack.c.l.b16 %v984
        %v1018 = vunpack.c.l.b16 %v985
        %v1019 = vpack.c.b16 %v1012, %v1011
        %v1020 = vpack.c.b16 %v1014, %v1013
        %v1021 = vpack.c.b16 %v1016, %v1015
        %v1022 = vpack.c.b16 %v1018, %v1017
        %v1043 = vunpack.c.l.b16 %v987
        %v1044 = vunpack.c.l.b16 %v988
        %v1045 = vunpack.c.l.b16 %v989
        %v1046 = vunpack.c.l.b16 %v990
        %v1047 = vunpack.c.l.b16 %v991
        %v1048 = vunpack.c.l.b16 %v992
        %v1049 = vunpack.c.l.b16 %v993
        %v1050 = vunpack.c.l.b16 %v994
        %v1051 = vunpack.c.l.b16 %v995
        %v1052 = vunpack.c.l.b16 %v996
        %v1053 = vunpack.c.l.b16 %v997
        %v1054 = vunpack.c.l.b16 %v998
        %v1055 = vunpack.c.l.b16 %v999
        %v1056 = vunpack.c.l.b16 %v1000
        %v1057 = vunpack.c.l.b16 %v1001
        %v1058 = vunpack.c.l.b16 %v1002
        %v1059 = vpack.c.b16 %v1044, %v1043
        %v1060 = vpack.c.b16 %v1046, %v1045
        %v1061 = vpack.c.b16 %v1048, %v1047
        %v1062 = vpack.c.b16 %v1050, %v1049
        %v1063 = vpack.c.b16 %v1052, %v1051
        %v1064 = vpack.c.b16 %v1054, %v1053
        %v1065 = vpack.c.b16 %v1056, %v1055
        %v1066 = vpack.c.b16 %v1058, %v1057
        %1075 = vmatprep.subr.bf16.mxu0 0
        %1076 = vmatpush1.bf16.msra.mxu0 %v1059
        %1077 = vmatprep.subr.bf16.mxu0 0
        %1078 = vmatpush1.bf16.msra.mxu0 %v1060
        %1079 = vmatprep.subr.bf16.mxu0 0
        %1080 = vmatpush1.bf16.msra.mxu0 %v1061
        %1081 = vmatprep.subr.bf16.mxu0 0
        %1082 = vmatpush1.bf16.msra.mxu0 %v1062
        %1083 = vmatprep.subr.bf16.mxu0 0
        %1084 = vmatpush1.bf16.msra.mxu0 %v1063
        %1085 = vmatprep.subr.bf16.mxu0 0
        %1086 = vmatpush1.bf16.msra.mxu0 %v1064
        %1087 = vmatprep.subr.bf16.mxu0 0
        %1088 = vmatpush1.bf16.msra.mxu0 %v1065
        %1089 = vmatprep.subr.bf16.mxu0 0
        %1090 = vmatpush1.bf16.msra.mxu0 %v1066
        %1091 = vmatprep.subr.bf16.mxu0 0
        %1092 = vmatpush1.bf16.msra.mxu0 0
        %1093 = vmatprep.subr.bf16.mxu0 0
        %1094 = vmatpush1.bf16.msra.mxu0 0
        %1095 = vmatprep.subr.bf16.mxu0 0
        %1096 = vmatpush1.bf16.msra.mxu0 0
        %1097 = vmatprep.subr.bf16.mxu0 0
        %1098 = vmatpush1.bf16.msra.mxu0 0
        %1099 = vmatprep.subr.bf16.mxu0 0
        %1100 = vmatpush1.bf16.msra.mxu0 0
        %1101 = vmatprep.subr.bf16.mxu0 0
        %1102 = vmatpush1.bf16.msra.mxu0 0
        %1103 = vmatprep.subr.bf16.mxu0 0
        %1104 = vmatpush1.bf16.msra.mxu0 0
        %1105 = vmatprep.subr.bf16.mxu0 0
        %1106 = vmatpush1.bf16.msra.mxu0 0
        %1107 = vmatprep.mubr.bf16.mxu0 0
        %1108 = vmatmul.mubr.bf16.gmra.mrb[0].mxu0 %v1019
        %v1109 = vpop.f32.mrb[0].mxu0
        %v1110 = vadd.f32 0.0, %v1109
        %v1111 = vpop.f32.mrb[0].mxu0
        %v1112 = vpop.f32.mrb[0].mxu0
        %v1113 = vadd.f32 0.0, %v1112
        %v1114 = vpop.f32.mrb[0].mxu0
        %1115 = vmatprep.mubr.bf16.mxu0 0
        %1116 = vmatmul.mubr.bf16.gmra.mrb[0].mxu0 %v1020
        %v1117 = vpop.f32.mrb[0].mxu0
        %v1118 = vadd.f32 0.0, %v1117
        %v1119 = vpop.f32.mrb[0].mxu0
        %v1120 = vpop.f32.mrb[0].mxu0
        %v1121 = vadd.f32 0.0, %v1120
        %v1122 = vpop.f32.mrb[0].mxu0
        %1123 = vmatprep.mubr.bf16.mxu0 0
        %1124 = vmatmul.mubr.bf16.gmra.mrb[0].mxu0 %v1021
        %v1125 = vpop.f32.mrb[0].mxu0
        %v1126 = vadd.f32 0.0, %v1125
        %v1127 = vpop.f32.mrb[0].mxu0
        %v1128 = vpop.f32.mrb[0].mxu0
        %v1129 = vadd.f32 0.0, %v1128
        %v1130 = vpop.f32.mrb[0].mxu0
        %1131 = vmatprep.mubr.bf16.mxu0 0
        %1132 = vmatmul.mubr.bf16.gmra.mrb[0].mxu0 %v1022
        %v1133 = vpop.f32.mrb[0].mxu0
        %v1134 = vadd.f32 0.0, %v1133
        %v1135 = vpop.f32.mrb[0].mxu0
        %v1136 = vpop.f32.mrb[0].mxu0
        %v1137 = vadd.f32 0.0, %v1136
        %v1138 = vpop.f32.mrb[0].mxu0
        %1139 = vdwg.mxu0
        %v1140 = vld [vmem:[#allocation2] sm:$0xff]
        %v1141 = vld [vmem:[#allocation2 + $0x8] sm:$0xff]
        %v1142 = vld [vmem:[#allocation2 + $0x10] sm:$0xff]
        %v1143 = vld [vmem:[#allocation2 + $0x18] sm:$0xff]
        %v1144 = vld [vmem:[#allocation2 + $0x20] sm:$0xff]
        %v1145 = vld [vmem:[#allocation2 + $0x28] sm:$0xff]
        %v1146 = vld [vmem:[#allocation2 + $0x30] sm:$0xff]
        %v1147 = vld [vmem:[#allocation2 + $0x38] sm:$0xff]
        %v1148 = vadd.f32 %v1140, %v1110
        %v1149 = vadd.f32 %v1141, %v1113
        %v1150 = vadd.f32 %v1142, %v1118
        %v1151 = vadd.f32 %v1143, %v1121
        %v1152 = vadd.f32 %v1144, %v1126
        %v1153 = vadd.f32 %v1145, %v1129
        %v1154 = vadd.f32 %v1146, %v1134
        %v1155 = vadd.f32 %v1147, %v1137
        %1156 = vst [vmem:[#allocation2] sm:$0xff] %v1148
        %1157 = vst [vmem:[#allocation2 + $0x8] sm:$0xff] %v1149
        %1158 = vst [vmem:[#allocation2 + $0x10] sm:$0xff] %v1150
        %1159 = vst [vmem:[#allocation2 + $0x18] sm:$0xff] %v1151
        %1160 = vst [vmem:[#allocation2 + $0x20] sm:$0xff] %v1152
        %1161 = vst [vmem:[#allocation2 + $0x28] sm:$0xff] %v1153
        %1162 = vst [vmem:[#allocation2 + $0x30] sm:$0xff] %v1154
        %1163 = vst [vmem:[#allocation2 + $0x38] sm:$0xff] %v1155
        %v1164 = vld [vmem:[%s320] sm:$0xf]
        %v1165 = vld [vmem:[%s320 + $0x8] sm:$0xf]
        %v1166 = vld [vmem:[%s320 + $0x10] sm:$0xf]
        %v1167 = vld [vmem:[%s320 + $0x18] sm:$0xf]
        %v1168 = vld [vmem:[%s320 + $0x20] sm:$0xf]
        %v1169 = vld [vmem:[%s320 + $0x28] sm:$0xf]
        %v1170 = vld [vmem:[%s320 + $0x30] sm:$0xf]
        %v1171 = vld [vmem:[%s320 + $0x38] sm:$0xf]
        %s1172 = scalar_lea.vmem %s4, 256
        %v1173 = vld [vmem:[%s1172] sm:$0xf]
        %v1174 = vld [vmem:[%s1172 + $0x4] sm:$0xf]
        %v1175 = vld [vmem:[%s1172 + $0x8] sm:$0xf]
        %v1176 = vld [vmem:[%s1172 + $0xc] sm:$0xf]
        %v1177 = vld [vmem:[%s1172 + $0x10] sm:$0xf]
        %v1178 = vld [vmem:[%s1172 + $0x14] sm:$0xf]
        %v1179 = vld [vmem:[%s1172 + $0x18] sm:$0xf]
        %v1180 = vld [vmem:[%s1172 + $0x1c] sm:$0xf]
        %v1181 = vld [vmem:[%s1172 + $0x20] sm:$0xf]
        %v1182 = vld [vmem:[%s1172 + $0x24] sm:$0xf]
        %v1183 = vld [vmem:[%s1172 + $0x28] sm:$0xf]
        %v1184 = vld [vmem:[%s1172 + $0x2c] sm:$0xf]
        %v1185 = vld [vmem:[%s1172 + $0x30] sm:$0xf]
        %v1186 = vld [vmem:[%s1172 + $0x34] sm:$0xf]
        %v1187 = vld [vmem:[%s1172 + $0x38] sm:$0xf]
        %v1188 = vld [vmem:[%s1172 + $0x3c] sm:$0xf]
        %v1197 = vunpack.c.l.b16 %v1164
        %v1198 = vunpack.c.l.b16 %v1165
        %v1199 = vunpack.c.l.b16 %v1166
        %v1200 = vunpack.c.l.b16 %v1167
        %v1201 = vunpack.c.l.b16 %v1168
        %v1202 = vunpack.c.l.b16 %v1169
        %v1203 = vunpack.c.l.b16 %v1170
        %v1204 = vunpack.c.l.b16 %v1171
        %v1205 = vpack.c.b16 %v1198, %v1197
        %v1206 = vpack.c.b16 %v1200, %v1199
        %v1207 = vpack.c.b16 %v1202, %v1201
        %v1208 = vpack.c.b16 %v1204, %v1203
        %v1229 = vunpack.c.l.b16 %v1173
        %v1230 = vunpack.c.l.b16 %v1174
        %v1231 = vunpack.c.l.b16 %v1175
        %v1232 = vunpack.c.l.b16 %v1176
        %v1233 = vunpack.c.l.b16 %v1177
        %v1234 = vunpack.c.l.b16 %v1178
        %v1235 = vunpack.c.l.b16 %v1179
        %v1236 = vunpack.c.l.b16 %v1180
        %v1237 = vunpack.c.l.b16 %v1181
        %v1238 = vunpack.c.l.b16 %v1182
        %v1239 = vunpack.c.l.b16 %v1183
        %v1240 = vunpack.c.l.b16 %v1184
        %v1241 = vunpack.c.l.b16 %v1185
        %v1242 = vunpack.c.l.b16 %v1186
        %v1243 = vunpack.c.l.b16 %v1187
        %v1244 = vunpack.c.l.b16 %v1188
        %v1245 = vpack.c.b16 %v1230, %v1229
        %v1246 = vpack.c.b16 %v1232, %v1231
        %v1247 = vpack.c.b16 %v1234, %v1233
        %v1248 = vpack.c.b16 %v1236, %v1235
        %v1249 = vpack.c.b16 %v1238, %v1237
        %v1250 = vpack.c.b16 %v1240, %v1239
        %v1251 = vpack.c.b16 %v1242, %v1241
        %v1252 = vpack.c.b16 %v1244, %v1243
        %1261 = vmatprep.subr.bf16.mxu0 0
        %1262 = vmatpush1.bf16.msra.mxu0 %v1245
        %1263 = vmatprep.subr.bf16.mxu0 0
        %1264 = vmatpush1.bf16.msra.mxu0 %v1246
        %1265 = vmatprep.subr.bf16.mxu0 0
        %1266 = vmatpush1.bf16.msra.mxu0 %v1247
        %1267 = vmatprep.subr.bf16.mxu0 0
        %1268 = vmatpush1.bf16.msra.mxu0 %v1248
        %1269 = vmatprep.subr.bf16.mxu0 0
        %1270 = vmatpush1.bf16.msra.mxu0 %v1249
        %1271 = vmatprep.subr.bf16.mxu0 0
        %1272 = vmatpush1.bf16.msra.mxu0 %v1250
        %1273 = vmatprep.subr.bf16.mxu0 0
        %1274 = vmatpush1.bf16.msra.mxu0 %v1251
        %1275 = vmatprep.subr.bf16.mxu0 0
        %1276 = vmatpush1.bf16.msra.mxu0 %v1252
        %1277 = vmatprep.subr.bf16.mxu0 0
        %1278 = vmatpush1.bf16.msra.mxu0 0
        %1279 = vmatprep.subr.bf16.mxu0 0
        %1280 = vmatpush1.bf16.msra.mxu0 0
        %1281 = vmatprep.subr.bf16.mxu0 0
        %1282 = vmatpush1.bf16.msra.mxu0 0
        %1283 = vmatprep.subr.bf16.mxu0 0
        %1284 = vmatpush1.bf16.msra.mxu0 0
        %1285 = vmatprep.subr.bf16.mxu0 0
        %1286 = vmatpush1.bf16.msra.mxu0 0
        %1287 = vmatprep.subr.bf16.mxu0 0
        %1288 = vmatpush1.bf16.msra.mxu0 0
        %1289 = vmatprep.subr.bf16.mxu0 0
        %1290 = vmatpush1.bf16.msra.mxu0 0
        %1291 = vmatprep.subr.bf16.mxu0 0
        %1292 = vmatpush1.bf16.msra.mxu0 0
        %1293 = vmatprep.mubr.bf16.mxu0 0
        %1294 = vmatmul.mubr.bf16.gmra.mrb[0].mxu0 %v1205
        %v1295 = vpop.f32.mrb[0].mxu0
        %v1296 = vadd.f32 0.0, %v1295
        %v1297 = vpop.f32.mrb[0].mxu0
        %v1298 = vpop.f32.mrb[0].mxu0
        %v1299 = vadd.f32 0.0, %v1298
        %v1300 = vpop.f32.mrb[0].mxu0
        %1301 = vmatprep.mubr.bf16.mxu0 0
        %1302 = vmatmul.mubr.bf16.gmra.mrb[0].mxu0 %v1206
        %v1303 = vpop.f32.mrb[0].mxu0
        %v1304 = vadd.f32 0.0, %v1303
        %v1305 = vpop.f32.mrb[0].mxu0
        %v1306 = vpop.f32.mrb[0].mxu0
        %v1307 = vadd.f32 0.0, %v1306
        %v1308 = vpop.f32.mrb[0].mxu0
        %1309 = vmatprep.mubr.bf16.mxu0 0
        %1310 = vmatmul.mubr.bf16.gmra.mrb[0].mxu0 %v1207
        %v1311 = vpop.f32.mrb[0].mxu0
        %v1312 = vadd.f32 0.0, %v1311
        %v1313 = vpop.f32.mrb[0].mxu0
        %v1314 = vpop.f32.mrb[0].mxu0
        %v1315 = vadd.f32 0.0, %v1314
        %v1316 = vpop.f32.mrb[0].mxu0
        %1317 = vmatprep.mubr.bf16.mxu0 0
        %1318 = vmatmul.mubr.bf16.gmra.mrb[0].mxu0 %v1208
        %v1319 = vpop.f32.mrb[0].mxu0
        %v1320 = vadd.f32 0.0, %v1319
        %v1321 = vpop.f32.mrb[0].mxu0
        %v1322 = vpop.f32.mrb[0].mxu0
        %v1323 = vadd.f32 0.0, %v1322
        %v1324 = vpop.f32.mrb[0].mxu0
        %1325 = vdwg.mxu0
        %v1326 = vld [vmem:[#allocation2] sm:$0xff]
        %v1327 = vld [vmem:[#allocation2 + $0x8] sm:$0xff]
        %v1328 = vld [vmem:[#allocation2 + $0x10] sm:$0xff]
        %v1329 = vld [vmem:[#allocation2 + $0x18] sm:$0xff]
        %v1330 = vld [vmem:[#allocation2 + $0x20] sm:$0xff]
        %v1331 = vld [vmem:[#allocation2 + $0x28] sm:$0xff]
        %v1332 = vld [vmem:[#allocation2 + $0x30] sm:$0xff]
        %v1333 = vld [vmem:[#allocation2 + $0x38] sm:$0xff]
        %v1334 = vadd.f32 %v1326, %v1296
        %v1335 = vadd.f32 %v1327, %v1299
        %v1336 = vadd.f32 %v1328, %v1304
        %v1337 = vadd.f32 %v1329, %v1307
        %v1338 = vadd.f32 %v1330, %v1312
        %v1339 = vadd.f32 %v1331, %v1315
        %v1340 = vadd.f32 %v1332, %v1320
        %v1341 = vadd.f32 %v1333, %v1323
        %1342 = vst [vmem:[#allocation2] sm:$0xff] %v1334
        %1343 = vst [vmem:[#allocation2 + $0x8] sm:$0xff] %v1335
        %1344 = vst [vmem:[#allocation2 + $0x10] sm:$0xff] %v1336
        %1345 = vst [vmem:[#allocation2 + $0x18] sm:$0xff] %v1337
        %1346 = vst [vmem:[#allocation2 + $0x20] sm:$0xff] %v1338
        %1347 = vst [vmem:[#allocation2 + $0x28] sm:$0xff] %v1339
        %1348 = vst [vmem:[#allocation2 + $0x30] sm:$0xff] %v1340
        %1349 = vst [vmem:[#allocation2 + $0x38] sm:$0xff] %v1341
        %v1350 = vld [vmem:[%s315] sm:$0xf]
        %v1351 = vld [vmem:[%s315 + $0x4] sm:$0x1]
        %v1352 = vld [vmem:[%s315 + $0x8] sm:$0xf]
        %v1353 = vld [vmem:[%s315 + $0xc] sm:$0x1]
        %v1354 = vld [vmem:[%s315 + $0x10] sm:$0xf]
        %v1355 = vld [vmem:[%s315 + $0x14] sm:$0x1]
        %v1356 = vld [vmem:[%s315 + $0x18] sm:$0xf]
        %v1357 = vld [vmem:[%s315 + $0x1c] sm:$0x1]
        %v1358 = vld [vmem:[%s315 + $0x20] sm:$0xf]
        %v1359 = vld [vmem:[%s315 + $0x24] sm:$0x1]
        %v1360 = vld [vmem:[%s315 + $0x28] sm:$0xf]
        %v1361 = vld [vmem:[%s315 + $0x2c] sm:$0x1]
        %v1362 = vld [vmem:[%s315 + $0x30] sm:$0xf]
        %v1363 = vld [vmem:[%s315 + $0x34] sm:$0x1]
        %v1364 = vld [vmem:[%s315 + $0x38] sm:$0xf]
        %v1365 = vld [vmem:[%s315 + $0x3c] sm:$0x1]
        %v1367 = vshrl.u32 %v1350, 16
        %v1369 = vrot.slane %v1367, 4
        %v1370 = vshll.u32 %v1350, 16
        %v1372 = vrot.slane %v1370, 5
        %v1373 = vor.u32 %v1369, %v1372
        %v1374 = vrot.slane %v1373, 4
        %v1376 = vshll.u32 %v1351, 16
        %v1378 = vrot.slane %v1376, 5
        %v1379 = vsel %vm695, %v1374, %v1378
        %v1381 = vshrl.u32 %v1352, 16
        %v1383 = vrot.slane %v1381, 4
        %v1384 = vshll.u32 %v1352, 16
        %v1386 = vrot.slane %v1384, 5
        %v1387 = vor.u32 %v1383, %v1386
        %v1388 = vrot.slane %v1387, 4
        %v1390 = vshll.u32 %v1353, 16
        %v1392 = vrot.slane %v1390, 5
        %v1393 = vsel %vm695, %v1388, %v1392
        %v1395 = vshrl.u32 %v1354, 16
        %v1397 = vrot.slane %v1395, 4
        %v1398 = vshll.u32 %v1354, 16
        %v1400 = vrot.slane %v1398, 5
        %v1401 = vor.u32 %v1397, %v1400
        %v1402 = vrot.slane %v1401, 4
        %v1404 = vshll.u32 %v1355, 16
        %v1406 = vrot.slane %v1404, 5
        %v1407 = vsel %vm695, %v1402, %v1406
        %v1409 = vshrl.u32 %v1356, 16
        %v1411 = vrot.slane %v1409, 4
        %v1412 = vshll.u32 %v1356, 16
        %v1414 = vrot.slane %v1412, 5
        %v1415 = vor.u32 %v1411, %v1414
        %v1416 = vrot.slane %v1415, 4
        %v1418 = vshll.u32 %v1357, 16
        %v1420 = vrot.slane %v1418, 5
        %v1421 = vsel %vm695, %v1416, %v1420
        %v1423 = vshrl.u32 %v1358, 16
        %v1425 = vrot.slane %v1423, 4
        %v1426 = vshll.u32 %v1358, 16
        %v1428 = vrot.slane %v1426, 5
        %v1429 = vor.u32 %v1425, %v1428
        %v1430 = vrot.slane %v1429, 4
        %v1432 = vshll.u32 %v1359, 16
        %v1434 = vrot.slane %v1432, 5
        %v1435 = vsel %vm695, %v1430, %v1434
        %v1437 = vshrl.u32 %v1360, 16
        %v1439 = vrot.slane %v1437, 4
        %v1440 = vshll.u32 %v1360, 16
        %v1442 = vrot.slane %v1440, 5
        %v1443 = vor.u32 %v1439, %v1442
        %v1444 = vrot.slane %v1443, 4
        %v1446 = vshll.u32 %v1361, 16
        %v1448 = vrot.slane %v1446, 5
        %v1449 = vsel %vm695, %v1444, %v1448
        %v1451 = vshrl.u32 %v1362, 16
        %v1453 = vrot.slane %v1451, 4
        %v1454 = vshll.u32 %v1362, 16
        %v1456 = vrot.slane %v1454, 5
        %v1457 = vor.u32 %v1453, %v1456
        %v1458 = vrot.slane %v1457, 4
        %v1460 = vshll.u32 %v1363, 16
        %v1462 = vrot.slane %v1460, 5
        %v1463 = vsel %vm695, %v1458, %v1462
        %v1465 = vshrl.u32 %v1364, 16
        %v1467 = vrot.slane %v1465, 4
        %v1468 = vshll.u32 %v1364, 16
        %v1470 = vrot.slane %v1468, 5
        %v1471 = vor.u32 %v1467, %v1470
        %v1472 = vrot.slane %v1471, 4
        %v1474 = vshll.u32 %v1365, 16
        %v1476 = vrot.slane %v1474, 5
        %v1477 = vsel %vm695, %v1472, %v1476
        %s1478 = scalar_lea.vmem %s4, 320
        %v1479 = vld [vmem:[%s1478] sm:$0xf]
        %v1480 = vld [vmem:[%s1478 + $0x4] sm:$0xf]
        %v1481 = vld [vmem:[%s1478 + $0x8] sm:$0xf]
        %v1482 = vld [vmem:[%s1478 + $0xc] sm:$0xf]
        %v1483 = vld [vmem:[%s1478 + $0x10] sm:$0xf]
        %v1484 = vld [vmem:[%s1478 + $0x14] sm:$0xf]
        %v1485 = vld [vmem:[%s1478 + $0x18] sm:$0xf]
        %v1486 = vld [vmem:[%s1478 + $0x1c] sm:$0xf]
        %v1487 = vld [vmem:[%s1478 + $0x20] sm:$0xf]
        %v1488 = vld [vmem:[%s1478 + $0x24] sm:$0xf]
        %v1489 = vld [vmem:[%s1478 + $0x28] sm:$0xf]
        %v1490 = vld [vmem:[%s1478 + $0x2c] sm:$0xf]
        %v1491 = vld [vmem:[%s1478 + $0x30] sm:$0xf]
        %v1492 = vld [vmem:[%s1478 + $0x34] sm:$0xf]
        %v1493 = vld [vmem:[%s1478 + $0x38] sm:$0xf]
        %v1494 = vld [vmem:[%s1478 + $0x3c] sm:$0xf]
        %v1495 = vunpack.c.l.b16 %v1379
        %v1496 = vunpack.c.l.b16 %v1393
        %v1497 = vunpack.c.l.b16 %v1407
        %v1498 = vunpack.c.l.b16 %v1421
        %v1499 = vunpack.c.l.b16 %v1435
        %v1500 = vunpack.c.l.b16 %v1449
        %v1501 = vunpack.c.l.b16 %v1463
        %v1502 = vunpack.c.l.b16 %v1477
        %v1503 = vpack.c.b16 %v1496, %v1495
        %v1504 = vpack.c.b16 %v1498, %v1497
        %v1505 = vpack.c.b16 %v1500, %v1499
        %v1506 = vpack.c.b16 %v1502, %v1501
        %v1527 = vunpack.c.l.b16 %v1479
        %v1528 = vunpack.c.l.b16 %v1480
        %v1529 = vunpack.c.l.b16 %v1481
        %v1530 = vunpack.c.l.b16 %v1482
        %v1531 = vunpack.c.l.b16 %v1483
        %v1532 = vunpack.c.l.b16 %v1484
        %v1533 = vunpack.c.l.b16 %v1485
        %v1534 = vunpack.c.l.b16 %v1486
        %v1535 = vunpack.c.l.b16 %v1487
        %v1536 = vunpack.c.l.b16 %v1488
        %v1537 = vunpack.c.l.b16 %v1489
        %v1538 = vunpack.c.l.b16 %v1490
        %v1539 = vunpack.c.l.b16 %v1491
        %v1540 = vunpack.c.l.b16 %v1492
        %v1541 = vunpack.c.l.b16 %v1493
        %v1542 = vunpack.c.l.b16 %v1494
        %v1543 = vpack.c.b16 %v1528, %v1527
        %v1544 = vpack.c.b16 %v1530, %v1529
        %v1545 = vpack.c.b16 %v1532, %v1531
        %v1546 = vpack.c.b16 %v1534, %v1533
        %v1547 = vpack.c.b16 %v1536, %v1535
        %v1548 = vpack.c.b16 %v1538, %v1537
        %v1549 = vpack.c.b16 %v1540, %v1539
        %v1550 = vpack.c.b16 %v1542, %v1541
        %1559 = vmatprep.subr.bf16.mxu0 0
        %1560 = vmatpush1.bf16.msra.mxu0 %v1543
        %1561 = vmatprep.subr.bf16.mxu0 0
        %1562 = vmatpush1.bf16.msra.mxu0 %v1544
        %1563 = vmatprep.subr.bf16.mxu0 0
        %1564 = vmatpush1.bf16.msra.mxu0 %v1545
        %1565 = vmatprep.subr.bf16.mxu0 0
        %1566 = vmatpush1.bf16.msra.mxu0 %v1546
        %1567 = vmatprep.subr.bf16.mxu0 0
        %1568 = vmatpush1.bf16.msra.mxu0 %v1547
        %1569 = vmatprep.subr.bf16.mxu0 0
        %1570 = vmatpush1.bf16.msra.mxu0 %v1548
        %1571 = vmatprep.subr.bf16.mxu0 0
        %1572 = vmatpush1.bf16.msra.mxu0 %v1549
        %1573 = vmatprep.subr.bf16.mxu0 0
        %1574 = vmatpush1.bf16.msra.mxu0 %v1550
        %1575 = vmatprep.subr.bf16.mxu0 0
        %1576 = vmatpush1.bf16.msra.mxu0 0
        %1577 = vmatprep.subr.bf16.mxu0 0
        %1578 = vmatpush1.bf16.msra.mxu0 0
        %1579 = vmatprep.subr.bf16.mxu0 0
        %1580 = vmatpush1.bf16.msra.mxu0 0
        %1581 = vmatprep.subr.bf16.mxu0 0
        %1582 = vmatpush1.bf16.msra.mxu0 0
        %1583 = vmatprep.subr.bf16.mxu0 0
        %1584 = vmatpush1.bf16.msra.mxu0 0
        %1585 = vmatprep.subr.bf16.mxu0 0
        %1586 = vmatpush1.bf16.msra.mxu0 0
        %1587 = vmatprep.subr.bf16.mxu0 0
        %1588 = vmatpush1.bf16.msra.mxu0 0
        %1589 = vmatprep.subr.bf16.mxu0 0
        %1590 = vmatpush1.bf16.msra.mxu0 0
        %1591 = vmatprep.mubr.bf16.mxu0 0
        %1592 = vmatmul.mubr.bf16.gmra.mrb[0].mxu0 %v1503
        %v1593 = vpop.f32.mrb[0].mxu0
        %v1594 = vadd.f32 0.0, %v1593
        %v1595 = vpop.f32.mrb[0].mxu0
        %v1596 = vpop.f32.mrb[0].mxu0
        %v1597 = vadd.f32 0.0, %v1596
        %v1598 = vpop.f32.mrb[0].mxu0
        %1599 = vmatprep.mubr.bf16.mxu0 0
        %1600 = vmatmul.mubr.bf16.gmra.mrb[0].mxu0 %v1504
        %v1601 = vpop.f32.mrb[0].mxu0
        %v1602 = vadd.f32 0.0, %v1601
        %v1603 = vpop.f32.mrb[0].mxu0
        %v1604 = vpop.f32.mrb[0].mxu0
        %v1605 = vadd.f32 0.0, %v1604
        %v1606 = vpop.f32.mrb[0].mxu0
        %1607 = vmatprep.mubr.bf16.mxu0 0
        %1608 = vmatmul.mubr.bf16.gmra.mrb[0].mxu0 %v1505
        %v1609 = vpop.f32.mrb[0].mxu0
        %v1610 = vadd.f32 0.0, %v1609
        %v1611 = vpop.f32.mrb[0].mxu0
        %v1612 = vpop.f32.mrb[0].mxu0
        %v1613 = vadd.f32 0.0, %v1612
        %v1614 = vpop.f32.mrb[0].mxu0
        %1615 = vmatprep.mubr.bf16.mxu0 0
        %1616 = vmatmul.mubr.bf16.gmra.mrb[0].mxu0 %v1506
        %v1617 = vpop.f32.mrb[0].mxu0
        %v1618 = vadd.f32 0.0, %v1617
        %v1619 = vpop.f32.mrb[0].mxu0
        %v1620 = vpop.f32.mrb[0].mxu0
        %v1621 = vadd.f32 0.0, %v1620
        %v1622 = vpop.f32.mrb[0].mxu0
        %1623 = vdwg.mxu0
        %v1624 = vld [vmem:[#allocation2] sm:$0xff]
        %v1625 = vld [vmem:[#allocation2 + $0x8] sm:$0xff]
        %v1626 = vld [vmem:[#allocation2 + $0x10] sm:$0xff]
        %v1627 = vld [vmem:[#allocation2 + $0x18] sm:$0xff]
        %v1628 = vld [vmem:[#allocation2 + $0x20] sm:$0xff]
        %v1629 = vld [vmem:[#allocation2 + $0x28] sm:$0xff]
        %v1630 = vld [vmem:[#allocation2 + $0x30] sm:$0xff]
        %v1631 = vld [vmem:[#allocation2 + $0x38] sm:$0xff]
        %v1632 = vadd.f32 %v1624, %v1594
        %v1633 = vadd.f32 %v1625, %v1597
        %v1634 = vadd.f32 %v1626, %v1602
        %v1635 = vadd.f32 %v1627, %v1605
        %v1636 = vadd.f32 %v1628, %v1610
        %v1637 = vadd.f32 %v1629, %v1613
        %v1638 = vadd.f32 %v1630, %v1618
        %v1639 = vadd.f32 %v1631, %v1621
        %1640 = vst [vmem:[#allocation2] sm:$0xff] %v1632
        %1641 = vst [vmem:[#allocation2 + $0x8] sm:$0xff] %v1633
        %1642 = vst [vmem:[#allocation2 + $0x10] sm:$0xff] %v1634
        %1643 = vst [vmem:[#allocation2 + $0x18] sm:$0xff] %v1635
        %1644 = vst [vmem:[#allocation2 + $0x20] sm:$0xff] %v1636
        %1645 = vst [vmem:[#allocation2 + $0x28] sm:$0xff] %v1637
        %1646 = vst [vmem:[#allocation2 + $0x30] sm:$0xff] %v1638
        %1647 = vst [vmem:[#allocation2 + $0x38] sm:$0xff] %v1639
        %s1648 = scalar_lea.vmem %s305, 8
        %v1649 = vld [vmem:[%s1648] sm:$0xf]
        %v1650 = vld [vmem:[%s1648 + $0x8] sm:$0xf]
        %v1651 = vld [vmem:[%s1648 + $0x10] sm:$0xf]
        %v1652 = vld [vmem:[%s1648 + $0x18] sm:$0xf]
        %v1653 = vld [vmem:[%s1648 + $0x20] sm:$0xf]
        %v1654 = vld [vmem:[%s1648 + $0x28] sm:$0xf]
        %v1655 = vld [vmem:[%s1648 + $0x30] sm:$0xf]
        %v1656 = vld [vmem:[%s1648 + $0x38] sm:$0xf]
        %s1657 = scalar_lea.vmem %s4, 384
        %v1658 = vld [vmem:[%s1657] sm:$0xf]
        %v1659 = vld [vmem:[%s1657 + $0x4] sm:$0xf]
        %v1660 = vld [vmem:[%s1657 + $0x8] sm:$0xf]
        %v1661 = vld [vmem:[%s1657 + $0xc] sm:$0xf]
        %v1662 = vld [vmem:[%s1657 + $0x10] sm:$0xf]
        %v1663 = vld [vmem:[%s1657 + $0x14] sm:$0xf]
        %v1664 = vld [vmem:[%s1657 + $0x18] sm:$0xf]
        %v1665 = vld [vmem:[%s1657 + $0x1c] sm:$0xf]
        %v1666 = vld [vmem:[%s1657 + $0x20] sm:$0xf]
        %v1667 = vld [vmem:[%s1657 + $0x24] sm:$0xf]
        %v1668 = vld [vmem:[%s1657 + $0x28] sm:$0xf]
        %v1669 = vld [vmem:[%s1657 + $0x2c] sm:$0xf]
        %v1670 = vld [vmem:[%s1657 + $0x30] sm:$0xf]
        %v1671 = vld [vmem:[%s1657 + $0x34] sm:$0xf]
        %v1672 = vld [vmem:[%s1657 + $0x38] sm:$0xf]
        %v1673 = vld [vmem:[%s1657 + $0x3c] sm:$0xf]
        %v1682 = vunpack.c.l.b16 %v1649
        %v1683 = vunpack.c.l.b16 %v1650
        %v1684 = vunpack.c.l.b16 %v1651
        %v1685 = vunpack.c.l.b16 %v1652
        %v1686 = vunpack.c.l.b16 %v1653
        %v1687 = vunpack.c.l.b16 %v1654
        %v1688 = vunpack.c.l.b16 %v1655
        %v1689 = vunpack.c.l.b16 %v1656
        %v1690 = vpack.c.b16 %v1683, %v1682
        %v1691 = vpack.c.b16 %v1685, %v1684
        %v1692 = vpack.c.b16 %v1687, %v1686
        %v1693 = vpack.c.b16 %v1689, %v1688
        %v1714 = vunpack.c.l.b16 %v1658
        %v1715 = vunpack.c.l.b16 %v1659
        %v1716 = vunpack.c.l.b16 %v1660
        %v1717 = vunpack.c.l.b16 %v1661
        %v1718 = vunpack.c.l.b16 %v1662
        %v1719 = vunpack.c.l.b16 %v1663
        %v1720 = vunpack.c.l.b16 %v1664
        %v1721 = vunpack.c.l.b16 %v1665
        %v1722 = vunpack.c.l.b16 %v1666
        %v1723 = vunpack.c.l.b16 %v1667
        %v1724 = vunpack.c.l.b16 %v1668
        %v1725 = vunpack.c.l.b16 %v1669
        %v1726 = vunpack.c.l.b16 %v1670
        %v1727 = vunpack.c.l.b16 %v1671
        %v1728 = vunpack.c.l.b16 %v1672
        %v1729 = vunpack.c.l.b16 %v1673
        %v1730 = vpack.c.b16 %v1715, %v1714
        %v1731 = vpack.c.b16 %v1717, %v1716
        %v1732 = vpack.c.b16 %v1719, %v1718
        %v1733 = vpack.c.b16 %v1721, %v1720
        %v1734 = vpack.c.b16 %v1723, %v1722
        %v1735 = vpack.c.b16 %v1725, %v1724
        %v1736 = vpack.c.b16 %v1727, %v1726
        %v1737 = vpack.c.b16 %v1729, %v1728
        %1746 = vmatprep.subr.bf16.mxu0 0
        %1747 = vmatpush1.bf16.msra.mxu0 %v1730
        %1748 = vmatprep.subr.bf16.mxu0 0
        %1749 = vmatpush1.bf16.msra.mxu0 %v1731
        %1750 = vmatprep.subr.bf16.mxu0 0
        %1751 = vmatpush1.bf16.msra.mxu0 %v1732
        %1752 = vmatprep.subr.bf16.mxu0 0
        %1753 = vmatpush1.bf16.msra.mxu0 %v1733
        %1754 = vmatprep.subr.bf16.mxu0 0
        %1755 = vmatpush1.bf16.msra.mxu0 %v1734
        %1756 = vmatprep.subr.bf16.mxu0 0
        %1757 = vmatpush1.bf16.msra.mxu0 %v1735
        %1758 = vmatprep.subr.bf16.mxu0 0
        %1759 = vmatpush1.bf16.msra.mxu0 %v1736
        %1760 = vmatprep.subr.bf16.mxu0 0
        %1761 = vmatpush1.bf16.msra.mxu0 %v1737
        %1762 = vmatprep.subr.bf16.mxu0 0
        %1763 = vmatpush1.bf16.msra.mxu0 0
        %1764 = vmatprep.subr.bf16.mxu0 0
        %1765 = vmatpush1.bf16.msra.mxu0 0
        %1766 = vmatprep.subr.bf16.mxu0 0
        %1767 = vmatpush1.bf16.msra.mxu0 0
        %1768 = vmatprep.subr.bf16.mxu0 0
        %1769 = vmatpush1.bf16.msra.mxu0 0
        %1770 = vmatprep.subr.bf16.mxu0 0
        %1771 = vmatpush1.bf16.msra.mxu0 0
        %1772 = vmatprep.subr.bf16.mxu0 0
        %1773 = vmatpush1.bf16.msra.mxu0 0
        %1774 = vmatprep.subr.bf16.mxu0 0
        %1775 = vmatpush1.bf16.msra.mxu0 0
        %1776 = vmatprep.subr.bf16.mxu0 0
        %1777 = vmatpush1.bf16.msra.mxu0 0
        %1778 = vmatprep.mubr.bf16.mxu0 0
        %1779 = vmatmul.mubr.bf16.gmra.mrb[0].mxu0 %v1690
        %v1780 = vpop.f32.mrb[0].mxu0
        %v1781 = vadd.f32 0.0, %v1780
        %v1782 = vpop.f32.mrb[0].mxu0
        %v1783 = vpop.f32.mrb[0].mxu0
        %v1784 = vadd.f32 0.0, %v1783
        %v1785 = vpop.f32.mrb[0].mxu0
        %1786 = vmatprep.mubr.bf16.mxu0 0
        %1787 = vmatmul.mubr.bf16.gmra.mrb[0].mxu0 %v1691
        %v1788 = vpop.f32.mrb[0].mxu0
        %v1789 = vadd.f32 0.0, %v1788
        %v1790 = vpop.f32.mrb[0].mxu0
        %v1791 = vpop.f32.mrb[0].mxu0
        %v1792 = vadd.f32 0.0, %v1791
        %v1793 = vpop.f32.mrb[0].mxu0
        %1794 = vmatprep.mubr.bf16.mxu0 0
        %1795 = vmatmul.mubr.bf16.gmra.mrb[0].mxu0 %v1692
        %v1796 = vpop.f32.mrb[0].mxu0
        %v1797 = vadd.f32 0.0, %v1796
        %v1798 = vpop.f32.mrb[0].mxu0
        %v1799 = vpop.f32.mrb[0].mxu0
        %v1800 = vadd.f32 0.0, %v1799
        %v1801 = vpop.f32.mrb[0].mxu0
        %1802 = vmatprep.mubr.bf16.mxu0 0
        %1803 = vmatmul.mubr.bf16.gmra.mrb[0].mxu0 %v1693
        %v1804 = vpop.f32.mrb[0].mxu0
        %v1805 = vadd.f32 0.0, %v1804
        %v1806 = vpop.f32.mrb[0].mxu0
        %v1807 = vpop.f32.mrb[0].mxu0
        %v1808 = vadd.f32 0.0, %v1807
        %v1809 = vpop.f32.mrb[0].mxu0
        %1810 = vdwg.mxu0
        %v1811 = vld [vmem:[#allocation2] sm:$0xff]
        %v1812 = vld [vmem:[#allocation2 + $0x8] sm:$0xff]
        %v1813 = vld [vmem:[#allocation2 + $0x10] sm:$0xff]
        %v1814 = vld [vmem:[#allocation2 + $0x18] sm:$0xff]
        %v1815 = vld [vmem:[#allocation2 + $0x20] sm:$0xff]
        %v1816 = vld [vmem:[#allocation2 + $0x28] sm:$0xff]
        %v1817 = vld [vmem:[#allocation2 + $0x30] sm:$0xff]
        %v1818 = vld [vmem:[#allocation2 + $0x38] sm:$0xff]
        %v1819 = vadd.f32 %v1811, %v1781
        %v1820 = vadd.f32 %v1812, %v1784
        %v1821 = vadd.f32 %v1813, %v1789
        %v1822 = vadd.f32 %v1814, %v1792
        %v1823 = vadd.f32 %v1815, %v1797
        %v1824 = vadd.f32 %v1816, %v1800
        %v1825 = vadd.f32 %v1817, %v1805
        %v1826 = vadd.f32 %v1818, %v1808
        %1827 = vst [vmem:[#allocation2] sm:$0xff] %v1819
        %1828 = vst [vmem:[#allocation2 + $0x8] sm:$0xff] %v1820
        %1829 = vst [vmem:[#allocation2 + $0x10] sm:$0xff] %v1821
        %1830 = vst [vmem:[#allocation2 + $0x18] sm:$0xff] %v1822
        %1831 = vst [vmem:[#allocation2 + $0x20] sm:$0xff] %v1823
        %1832 = vst [vmem:[#allocation2 + $0x28] sm:$0xff] %v1824
        %1833 = vst [vmem:[#allocation2 + $0x30] sm:$0xff] %v1825
        %1834 = vst [vmem:[#allocation2 + $0x38] sm:$0xff] %v1826
        %s1835 = scalar_lea.vmem %s310, 8
        %v1836 = vld [vmem:[%s1835] sm:$0xf]
        %v1837 = vld [vmem:[%s1835 + $0x8] sm:$0xf]
        %v1838 = vld [vmem:[%s1835 + $0x10] sm:$0xf]
        %v1839 = vld [vmem:[%s1835 + $0x18] sm:$0xf]
        %v1840 = vld [vmem:[%s1835 + $0x20] sm:$0xf]
        %v1841 = vld [vmem:[%s1835 + $0x28] sm:$0xf]
        %v1842 = vld [vmem:[%s1835 + $0x30] sm:$0xf]
        %v1843 = vld [vmem:[%s1835 + $0x38] sm:$0xf]
        %s1844 = scalar_lea.vmem %s4, 448
        %v1845 = vld [vmem:[%s1844] sm:$0xf]
        %v1846 = vld [vmem:[%s1844 + $0x4] sm:$0xf]
        %v1847 = vld [vmem:[%s1844 + $0x8] sm:$0xf]
        %v1848 = vld [vmem:[%s1844 + $0xc] sm:$0xf]
        %v1849 = vld [vmem:[%s1844 + $0x10] sm:$0xf]
        %v1850 = vld [vmem:[%s1844 + $0x14] sm:$0xf]
        %v1851 = vld [vmem:[%s1844 + $0x18] sm:$0xf]
        %v1852 = vld [vmem:[%s1844 + $0x1c] sm:$0xf]
        %v1853 = vld [vmem:[%s1844 + $0x20] sm:$0xf]
        %v1854 = vld [vmem:[%s1844 + $0x24] sm:$0xf]
        %v1855 = vld [vmem:[%s1844 + $0x28] sm:$0xf]
        %v1856 = vld [vmem:[%s1844 + $0x2c] sm:$0xf]
        %v1857 = vld [vmem:[%s1844 + $0x30] sm:$0xf]
        %v1858 = vld [vmem:[%s1844 + $0x34] sm:$0xf]
        %v1859 = vld [vmem:[%s1844 + $0x38] sm:$0xf]
        %v1860 = vld [vmem:[%s1844 + $0x3c] sm:$0xf]
        %v1869 = vunpack.c.l.b16 %v1836
        %v1870 = vunpack.c.l.b16 %v1837
        %v1871 = vunpack.c.l.b16 %v1838
        %v1872 = vunpack.c.l.b16 %v1839
        %v1873 = vunpack.c.l.b16 %v1840
        %v1874 = vunpack.c.l.b16 %v1841
        %v1875 = vunpack.c.l.b16 %v1842
        %v1876 = vunpack.c.l.b16 %v1843
        %v1877 = vpack.c.b16 %v1870, %v1869
        %v1878 = vpack.c.b16 %v1872, %v1871
        %v1879 = vpack.c.b16 %v1874, %v1873
        %v1880 = vpack.c.b16 %v1876, %v1875
        %v1901 = vunpack.c.l.b16 %v1845
        %v1902 = vunpack.c.l.b16 %v1846
        %v1903 = vunpack.c.l.b16 %v1847
        %v1904 = vunpack.c.l.b16 %v1848
        %v1905 = vunpack.c.l.b16 %v1849
        %v1906 = vunpack.c.l.b16 %v1850
        %v1907 = vunpack.c.l.b16 %v1851
        %v1908 = vunpack.c.l.b16 %v1852
        %v1909 = vunpack.c.l.b16 %v1853
        %v1910 = vunpack.c.l.b16 %v1854
        %v1911 = vunpack.c.l.b16 %v1855
        %v1912 = vunpack.c.l.b16 %v1856
        %v1913 = vunpack.c.l.b16 %v1857
        %v1914 = vunpack.c.l.b16 %v1858
        %v1915 = vunpack.c.l.b16 %v1859
        %v1916 = vunpack.c.l.b16 %v1860
        %v1917 = vpack.c.b16 %v1902, %v1901
        %v1918 = vpack.c.b16 %v1904, %v1903
        %v1919 = vpack.c.b16 %v1906, %v1905
        %v1920 = vpack.c.b16 %v1908, %v1907
        %v1921 = vpack.c.b16 %v1910, %v1909
        %v1922 = vpack.c.b16 %v1912, %v1911
        %v1923 = vpack.c.b16 %v1914, %v1913
        %v1924 = vpack.c.b16 %v1916, %v1915
        %1933 = vmatprep.subr.bf16.mxu0 0
        %1934 = vmatpush1.bf16.msra.mxu0 %v1917
        %1935 = vmatprep.subr.bf16.mxu0 0
        %1936 = vmatpush1.bf16.msra.mxu0 %v1918
        %1937 = vmatprep.subr.bf16.mxu0 0
        %1938 = vmatpush1.bf16.msra.mxu0 %v1919
        %1939 = vmatprep.subr.bf16.mxu0 0
        %1940 = vmatpush1.bf16.msra.mxu0 %v1920
        %1941 = vmatprep.subr.bf16.mxu0 0
        %1942 = vmatpush1.bf16.msra.mxu0 %v1921
        %1943 = vmatprep.subr.bf16.mxu0 0
        %1944 = vmatpush1.bf16.msra.mxu0 %v1922
        %1945 = vmatprep.subr.bf16.mxu0 0
        %1946 = vmatpush1.bf16.msra.mxu0 %v1923
        %1947 = vmatprep.subr.bf16.mxu0 0
        %1948 = vmatpush1.bf16.msra.mxu0 %v1924
        %1949 = vmatprep.subr.bf16.mxu0 0
        %1950 = vmatpush1.bf16.msra.mxu0 0
        %1951 = vmatprep.subr.bf16.mxu0 0
        %1952 = vmatpush1.bf16.msra.mxu0 0
        %1953 = vmatprep.subr.bf16.mxu0 0
        %1954 = vmatpush1.bf16.msra.mxu0 0
        %1955 = vmatprep.subr.bf16.mxu0 0
        %1956 = vmatpush1.bf16.msra.mxu0 0
        %1957 = vmatprep.subr.bf16.mxu0 0
        %1958 = vmatpush1.bf16.msra.mxu0 0
        %1959 = vmatprep.subr.bf16.mxu0 0
        %1960 = vmatpush1.bf16.msra.mxu0 0
        %1961 = vmatprep.subr.bf16.mxu0 0
        %1962 = vmatpush1.bf16.msra.mxu0 0
        %1963 = vmatprep.subr.bf16.mxu0 0
        %1964 = vmatpush1.bf16.msra.mxu0 0
        %1965 = vmatprep.mubr.bf16.mxu0 0
        %1966 = vmatmul.mubr.bf16.gmra.mrb[0].mxu0 %v1877
        %v1967 = vpop.f32.mrb[0].mxu0
        %v1968 = vadd.f32 0.0, %v1967
        %v1969 = vpop.f32.mrb[0].mxu0
        %v1970 = vpop.f32.mrb[0].mxu0
        %v1971 = vadd.f32 0.0, %v1970
        %v1972 = vpop.f32.mrb[0].mxu0
        %1973 = vmatprep.mubr.bf16.mxu0 0
        %1974 = vmatmul.mubr.bf16.gmra.mrb[0].mxu0 %v1878
        %v1975 = vpop.f32.mrb[0].mxu0
        %v1976 = vadd.f32 0.0, %v1975
        %v1977 = vpop.f32.mrb[0].mxu0
        %v1978 = vpop.f32.mrb[0].mxu0
        %v1979 = vadd.f32 0.0, %v1978
        %v1980 = vpop.f32.mrb[0].mxu0
        %1981 = vmatprep.mubr.bf16.mxu0 0
        %1982 = vmatmul.mubr.bf16.gmra.mrb[0].mxu0 %v1879
        %v1983 = vpop.f32.mrb[0].mxu0
        %v1984 = vadd.f32 0.0, %v1983
        %v1985 = vpop.f32.mrb[0].mxu0
        %v1986 = vpop.f32.mrb[0].mxu0
        %v1987 = vadd.f32 0.0, %v1986
        %v1988 = vpop.f32.mrb[0].mxu0
        %1989 = vmatprep.mubr.bf16.mxu0 0
        %1990 = vmatmul.mubr.bf16.gmra.mrb[0].mxu0 %v1880
        %v1991 = vpop.f32.mrb[0].mxu0
        %v1992 = vadd.f32 0.0, %v1991
        %v1993 = vpop.f32.mrb[0].mxu0
        %v1994 = vpop.f32.mrb[0].mxu0
        %v1995 = vadd.f32 0.0, %v1994
        %v1996 = vpop.f32.mrb[0].mxu0
        %1997 = vdwg.mxu0
        %v1998 = vld [vmem:[#allocation2] sm:$0xff]
        %v1999 = vld [vmem:[#allocation2 + $0x8] sm:$0xff]
        %v2000 = vld [vmem:[#allocation2 + $0x10] sm:$0xff]
        %v2001 = vld [vmem:[#allocation2 + $0x18] sm:$0xff]
        %v2002 = vld [vmem:[#allocation2 + $0x20] sm:$0xff]
        %v2003 = vld [vmem:[#allocation2 + $0x28] sm:$0xff]
        %v2004 = vld [vmem:[#allocation2 + $0x30] sm:$0xff]
        %v2005 = vld [vmem:[#allocation2 + $0x38] sm:$0xff]
        %v2006 = vadd.f32 %v1998, %v1968
        %v2007 = vadd.f32 %v1999, %v1971
        %v2008 = vadd.f32 %v2000, %v1976
        %v2009 = vadd.f32 %v2001, %v1979
        %v2010 = vadd.f32 %v2002, %v1984
        %v2011 = vadd.f32 %v2003, %v1987
        %v2012 = vadd.f32 %v2004, %v1992
        %v2013 = vadd.f32 %v2005, %v1995
        %2014 = vst [vmem:[#allocation2] sm:$0xff] %v2006
        %2015 = vst [vmem:[#allocation2 + $0x8] sm:$0xff] %v2007
        %2016 = vst [vmem:[#allocation2 + $0x10] sm:$0xff] %v2008
        %2017 = vst [vmem:[#allocation2 + $0x18] sm:$0xff] %v2009
        %2018 = vst [vmem:[#allocation2 + $0x20] sm:$0xff] %v2010
        %2019 = vst [vmem:[#allocation2 + $0x28] sm:$0xff] %v2011
        %2020 = vst [vmem:[#allocation2 + $0x30] sm:$0xff] %v2012
        %2021 = vst [vmem:[#allocation2 + $0x38] sm:$0xff] %v2013
        %v2022 = vld [vmem:[%s1648] sm:$0xf]
        %v2023 = vld [vmem:[%s1648 + $0x4] sm:$0x1]
        %v2024 = vld [vmem:[%s1648 + $0x8] sm:$0xf]
        %v2025 = vld [vmem:[%s1648 + $0xc] sm:$0x1]
        %v2026 = vld [vmem:[%s1648 + $0x10] sm:$0xf]
        %v2027 = vld [vmem:[%s1648 + $0x14] sm:$0x1]
        %v2028 = vld [vmem:[%s1648 + $0x18] sm:$0xf]
        %v2029 = vld [vmem:[%s1648 + $0x1c] sm:$0x1]
        %v2030 = vld [vmem:[%s1648 + $0x20] sm:$0xf]
        %v2031 = vld [vmem:[%s1648 + $0x24] sm:$0x1]
        %v2032 = vld [vmem:[%s1648 + $0x28] sm:$0xf]
        %v2033 = vld [vmem:[%s1648 + $0x2c] sm:$0x1]
        %v2034 = vld [vmem:[%s1648 + $0x30] sm:$0xf]
        %v2035 = vld [vmem:[%s1648 + $0x34] sm:$0x1]
        %v2036 = vld [vmem:[%s1648 + $0x38] sm:$0xf]
        %v2037 = vld [vmem:[%s1648 + $0x3c] sm:$0x1]
        %v2039 = vshrl.u32 %v2022, 16
        %v2041 = vrot.slane %v2039, 4
        %v2042 = vshll.u32 %v2022, 16
        %v2044 = vrot.slane %v2042, 5
        %v2045 = vor.u32 %v2041, %v2044
        %v2046 = vrot.slane %v2045, 4
        %v2048 = vshll.u32 %v2023, 16
        %v2050 = vrot.slane %v2048, 5
        %v2051 = vsel %vm695, %v2046, %v2050
        %v2053 = vshrl.u32 %v2024, 16
        %v2055 = vrot.slane %v2053, 4
        %v2056 = vshll.u32 %v2024, 16
        %v2058 = vrot.slane %v2056, 5
        %v2059 = vor.u32 %v2055, %v2058
        %v2060 = vrot.slane %v2059, 4
        %v2062 = vshll.u32 %v2025, 16
        %v2064 = vrot.slane %v2062, 5
        %v2065 = vsel %vm695, %v2060, %v2064
        %v2067 = vshrl.u32 %v2026, 16
        %v2069 = vrot.slane %v2067, 4
        %v2070 = vshll.u32 %v2026, 16
        %v2072 = vrot.slane %v2070, 5
        %v2073 = vor.u32 %v2069, %v2072
        %v2074 = vrot.slane %v2073, 4
        %v2076 = vshll.u32 %v2027, 16
        %v2078 = vrot.slane %v2076, 5
        %v2079 = vsel %vm695, %v2074, %v2078
        %v2081 = vshrl.u32 %v2028, 16
        %v2083 = vrot.slane %v2081, 4
        %v2084 = vshll.u32 %v2028, 16
        %v2086 = vrot.slane %v2084, 5
        %v2087 = vor.u32 %v2083, %v2086
        %v2088 = vrot.slane %v2087, 4
        %v2090 = vshll.u32 %v2029, 16
        %v2092 = vrot.slane %v2090, 5
        %v2093 = vsel %vm695, %v2088, %v2092
        %v2095 = vshrl.u32 %v2030, 16
        %v2097 = vrot.slane %v2095, 4
        %v2098 = vshll.u32 %v2030, 16
        %v2100 = vrot.slane %v2098, 5
        %v2101 = vor.u32 %v2097, %v2100
        %v2102 = vrot.slane %v2101, 4
        %v2104 = vshll.u32 %v2031, 16
        %v2106 = vrot.slane %v2104, 5
        %v2107 = vsel %vm695, %v2102, %v2106
        %v2109 = vshrl.u32 %v2032, 16
        %v2111 = vrot.slane %v2109, 4
        %v2112 = vshll.u32 %v2032, 16
        %v2114 = vrot.slane %v2112, 5
        %v2115 = vor.u32 %v2111, %v2114
        %v2116 = vrot.slane %v2115, 4
        %v2118 = vshll.u32 %v2033, 16
        %v2120 = vrot.slane %v2118, 5
        %v2121 = vsel %vm695, %v2116, %v2120
        %v2123 = vshrl.u32 %v2034, 16
        %v2125 = vrot.slane %v2123, 4
        %v2126 = vshll.u32 %v2034, 16
        %v2128 = vrot.slane %v2126, 5
        %v2129 = vor.u32 %v2125, %v2128
        %v2130 = vrot.slane %v2129, 4
        %v2132 = vshll.u32 %v2035, 16
        %v2134 = vrot.slane %v2132, 5
        %v2135 = vsel %vm695, %v2130, %v2134
        %v2137 = vshrl.u32 %v2036, 16
        %v2139 = vrot.slane %v2137, 4
        %v2140 = vshll.u32 %v2036, 16
        %v2142 = vrot.slane %v2140, 5
        %v2143 = vor.u32 %v2139, %v2142
        %v2144 = vrot.slane %v2143, 4
        %v2146 = vshll.u32 %v2037, 16
        %v2148 = vrot.slane %v2146, 5
        %v2149 = vsel %vm695, %v2144, %v2148
        %s2150 = scalar_lea.vmem %s4, 512
        %v2151 = vld [vmem:[%s2150] sm:$0xf]
        %v2152 = vld [vmem:[%s2150 + $0x4] sm:$0xf]
        %v2153 = vld [vmem:[%s2150 + $0x8] sm:$0xf]
        %v2154 = vld [vmem:[%s2150 + $0xc] sm:$0xf]
        %v2155 = vld [vmem:[%s2150 + $0x10] sm:$0xf]
        %v2156 = vld [vmem:[%s2150 + $0x14] sm:$0xf]
        %v2157 = vld [vmem:[%s2150 + $0x18] sm:$0xf]
        %v2158 = vld [vmem:[%s2150 + $0x1c] sm:$0xf]
        %v2159 = vld [vmem:[%s2150 + $0x20] sm:$0xf]
        %v2160 = vld [vmem:[%s2150 + $0x24] sm:$0xf]
        %v2161 = vld [vmem:[%s2150 + $0x28] sm:$0xf]
        %v2162 = vld [vmem:[%s2150 + $0x2c] sm:$0xf]
        %v2163 = vld [vmem:[%s2150 + $0x30] sm:$0xf]
        %v2164 = vld [vmem:[%s2150 + $0x34] sm:$0xf]
        %v2165 = vld [vmem:[%s2150 + $0x38] sm:$0xf]
        %v2166 = vld [vmem:[%s2150 + $0x3c] sm:$0xf]
        %v2167 = vunpack.c.l.b16 %v2051
        %v2168 = vunpack.c.l.b16 %v2065
        %v2169 = vunpack.c.l.b16 %v2079
        %v2170 = vunpack.c.l.b16 %v2093
        %v2171 = vunpack.c.l.b16 %v2107
        %v2172 = vunpack.c.l.b16 %v2121
        %v2173 = vunpack.c.l.b16 %v2135
        %v2174 = vunpack.c.l.b16 %v2149
        %v2175 = vpack.c.b16 %v2168, %v2167
        %v2176 = vpack.c.b16 %v2170, %v2169
        %v2177 = vpack.c.b16 %v2172, %v2171
        %v2178 = vpack.c.b16 %v2174, %v2173
        %v2199 = vunpack.c.l.b16 %v2151
        %v2200 = vunpack.c.l.b16 %v2152
        %v2201 = vunpack.c.l.b16 %v2153
        %v2202 = vunpack.c.l.b16 %v2154
        %v2203 = vunpack.c.l.b16 %v2155
        %v2204 = vunpack.c.l.b16 %v2156
        %v2205 = vunpack.c.l.b16 %v2157
        %v2206 = vunpack.c.l.b16 %v2158
        %v2207 = vunpack.c.l.b16 %v2159
        %v2208 = vunpack.c.l.b16 %v2160
        %v2209 = vunpack.c.l.b16 %v2161
        %v2210 = vunpack.c.l.b16 %v2162
        %v2211 = vunpack.c.l.b16 %v2163
        %v2212 = vunpack.c.l.b16 %v2164
        %v2213 = vunpack.c.l.b16 %v2165
        %v2214 = vunpack.c.l.b16 %v2166
        %v2215 = vpack.c.b16 %v2200, %v2199
        %v2216 = vpack.c.b16 %v2202, %v2201
        %v2217 = vpack.c.b16 %v2204, %v2203
        %v2218 = vpack.c.b16 %v2206, %v2205
        %v2219 = vpack.c.b16 %v2208, %v2207
        %v2220 = vpack.c.b16 %v2210, %v2209
        %v2221 = vpack.c.b16 %v2212, %v2211
        %v2222 = vpack.c.b16 %v2214, %v2213
        %2231 = vmatprep.subr.bf16.mxu0 0
        %2232 = vmatpush1.bf16.msra.mxu0 %v2215
        %2233 = vmatprep.subr.bf16.mxu0 0
        %2234 = vmatpush1.bf16.msra.mxu0 %v2216
        %2235 = vmatprep.subr.bf16.mxu0 0
        %2236 = vmatpush1.bf16.msra.mxu0 %v2217
        %2237 = vmatprep.subr.bf16.mxu0 0
        %2238 = vmatpush1.bf16.msra.mxu0 %v2218
        %2239 = vmatprep.subr.bf16.mxu0 0
        %2240 = vmatpush1.bf16.msra.mxu0 %v2219
        %2241 = vmatprep.subr.bf16.mxu0 0
        %2242 = vmatpush1.bf16.msra.mxu0 %v2220
        %2243 = vmatprep.subr.bf16.mxu0 0
        %2244 = vmatpush1.bf16.msra.mxu0 %v2221
        %2245 = vmatprep.subr.bf16.mxu0 0
        %2246 = vmatpush1.bf16.msra.mxu0 %v2222
        %2247 = vmatprep.subr.bf16.mxu0 0
        %2248 = vmatpush1.bf16.msra.mxu0 0
        %2249 = vmatprep.subr.bf16.mxu0 0
        %2250 = vmatpush1.bf16.msra.mxu0 0
        %2251 = vmatprep.subr.bf16.mxu0 0
        %2252 = vmatpush1.bf16.msra.mxu0 0
        %2253 = vmatprep.subr.bf16.mxu0 0
        %2254 = vmatpush1.bf16.msra.mxu0 0
        %2255 = vmatprep.subr.bf16.mxu0 0
        %2256 = vmatpush1.bf16.msra.mxu0 0
        %2257 = vmatprep.subr.bf16.mxu0 0
        %2258 = vmatpush1.bf16.msra.mxu0 0
        %2259 = vmatprep.subr.bf16.mxu0 0
        %2260 = vmatpush1.bf16.msra.mxu0 0
        %2261 = vmatprep.subr.bf16.mxu0 0
        %2262 = vmatpush1.bf16.msra.mxu0 0
        %2263 = vmatprep.mubr.bf16.mxu0 0
        %2264 = vmatmul.mubr.bf16.gmra.mrb[0].mxu0 %v2175
        %v2265 = vpop.f32.mrb[0].mxu0
        %v2266 = vadd.f32 0.0, %v2265
        %v2267 = vpop.f32.mrb[0].mxu0
        %v2268 = vpop.f32.mrb[0].mxu0
        %v2269 = vadd.f32 0.0, %v2268
        %v2270 = vpop.f32.mrb[0].mxu0
        %2271 = vmatprep.mubr.bf16.mxu0 0
        %2272 = vmatmul.mubr.bf16.gmra.mrb[0].mxu0 %v2176
        %v2273 = vpop.f32.mrb[0].mxu0
        %v2274 = vadd.f32 0.0, %v2273
        %v2275 = vpop.f32.mrb[0].mxu0
        %v2276 = vpop.f32.mrb[0].mxu0
        %v2277 = vadd.f32 0.0, %v2276
        %v2278 = vpop.f32.mrb[0].mxu0
        %2279 = vmatprep.mubr.bf16.mxu0 0
        %2280 = vmatmul.mubr.bf16.gmra.mrb[0].mxu0 %v2177
        %v2281 = vpop.f32.mrb[0].mxu0
        %v2282 = vadd.f32 0.0, %v2281
        %v2283 = vpop.f32.mrb[0].mxu0
        %v2284 = vpop.f32.mrb[0].mxu0
        %v2285 = vadd.f32 0.0, %v2284
        %v2286 = vpop.f32.mrb[0].mxu0
        %2287 = vmatprep.mubr.bf16.mxu0 0
        %2288 = vmatmul.mubr.bf16.gmra.mrb[0].mxu0 %v2178
        %v2289 = vpop.f32.mrb[0].mxu0
        %v2290 = vadd.f32 0.0, %v2289
        %v2291 = vpop.f32.mrb[0].mxu0
        %v2292 = vpop.f32.mrb[0].mxu0
        %v2293 = vadd.f32 0.0, %v2292
        %v2294 = vpop.f32.mrb[0].mxu0
        %2295 = vdwg.mxu0
        %v2296 = vld [vmem:[#allocation2] sm:$0xff]
        %v2297 = vld [vmem:[#allocation2 + $0x8] sm:$0xff]
        %v2298 = vld [vmem:[#allocation2 + $0x10] sm:$0xff]
        %v2299 = vld [vmem:[#allocation2 + $0x18] sm:$0xff]
        %v2300 = vld [vmem:[#allocation2 + $0x20] sm:$0xff]
        %v2301 = vld [vmem:[#allocation2 + $0x28] sm:$0xff]
        %v2302 = vld [vmem:[#allocation2 + $0x30] sm:$0xff]
        %v2303 = vld [vmem:[#allocation2 + $0x38] sm:$0xff]
        %v2304 = vadd.f32 %v2296, %v2266
        %v2305 = vadd.f32 %v2297, %v2269
        %v2306 = vadd.f32 %v2298, %v2274
        %v2307 = vadd.f32 %v2299, %v2277
        %v2308 = vadd.f32 %v2300, %v2282
        %v2309 = vadd.f32 %v2301, %v2285
        %v2310 = vadd.f32 %v2302, %v2290
        %v2311 = vadd.f32 %v2303, %v2293
        %2312 = vst [vmem:[#allocation2] sm:$0xff] %v2304
        %2313 = vst [vmem:[#allocation2 + $0x8] sm:$0xff] %v2305
        %2314 = vst [vmem:[#allocation2 + $0x10] sm:$0xff] %v2306
        %2315 = vst [vmem:[#allocation2 + $0x18] sm:$0xff] %v2307
        %2316 = vst [vmem:[#allocation2 + $0x20] sm:$0xff] %v2308
        %2317 = vst [vmem:[#allocation2 + $0x28] sm:$0xff] %v2309
        %2318 = vst [vmem:[#allocation2 + $0x30] sm:$0xff] %v2310
        %2319 = vst [vmem:[#allocation2 + $0x38] sm:$0xff] %v2311
        %v2320 = vld [vmem:[#allocation2] sm:$0xff]
        %v2321 = vld [vmem:[#allocation2 + $0x8] sm:$0xff]
        %v2322 = vld [vmem:[#allocation2 + $0x10] sm:$0xff]
        %v2323 = vld [vmem:[#allocation2 + $0x18] sm:$0xff]
        %v2324 = vld [vmem:[#allocation2 + $0x20] sm:$0xff]
        %v2325 = vld [vmem:[#allocation2 + $0x28] sm:$0xff]
        %v2326 = vld [vmem:[#allocation2 + $0x30] sm:$0xff]
        %v2327 = vld [vmem:[#allocation2 + $0x38] sm:$0xff]
        %v2328 = vpack.c.bf16 %v2321, %v2320
        %v2329 = vpack.c.bf16 %v2323, %v2322
        %v2330 = vpack.c.bf16 %v2325, %v2324
        %v2331 = vpack.c.bf16 %v2327, %v2326
        %v2336 = vunpack.c.l.b16 %v2328
        %v2337 = vunpack.c.h.b16 %v2328
        %v2338 = vunpack.c.l.b16 %v2329
        %v2339 = vunpack.c.h.b16 %v2329
        %v2340 = vunpack.c.l.b16 %v2330
        %v2341 = vunpack.c.h.b16 %v2330
        %v2342 = vunpack.c.l.b16 %v2331
        %v2343 = vunpack.c.h.b16 %v2331
        %v2344 = vpack.c.b16 %v2336, %v2336
        %v2345 = vpack.c.b16 %v2337, %v2337
        %v2346 = vpack.c.b16 %v2338, %v2338
        %v2347 = vpack.c.b16 %v2339, %v2339
        %v2348 = vpack.c.b16 %v2340, %v2340
        %v2349 = vpack.c.b16 %v2341, %v2341
        %v2350 = vpack.c.b16 %v2342, %v2342
        %v2351 = vpack.c.b16 %v2343, %v2343
        %2360 = vst [vmem:[%s293] sm:$0xf] %v2344
        %2361 = vst [vmem:[%s293 + $0x4] sm:$0xf] %v2345
        %2362 = vst [vmem:[%s293 + $0x8] sm:$0xf] %v2346
        %2363 = vst [vmem:[%s293 + $0xc] sm:$0xf] %v2347
        %2364 = vst [vmem:[%s293 + $0x10] sm:$0xf] %v2348
        %2365 = vst [vmem:[%s293 + $0x14] sm:$0xf] %v2349
        %2366 = vst [vmem:[%s293 + $0x18] sm:$0xf] %v2350
        %2367 = vst [vmem:[%s293 + $0x1c] sm:$0xf] %v2351
        %v2368 = vunpack.c.l.bf16 %v2328
        %v2369 = vunpack.c.h.bf16 %v2328
        %v2370 = vunpack.c.l.bf16 %v2329
        %v2371 = vunpack.c.h.bf16 %v2329
        %v2372 = vunpack.c.l.bf16 %v2330
        %v2373 = vunpack.c.h.bf16 %v2330
        %v2374 = vunpack.c.l.bf16 %v2331
        %v2375 = vunpack.c.h.bf16 %v2331
        %v2376 = vadd.f32 %v2368, %v2369
        %v2377 = vadd.f32 %v2376, %v2370
        %v2378 = vadd.f32 %v2377, %v2371
        %v2379 = vadd.f32 %v2378, %v2372
        %v2380 = vadd.f32 %v2379, %v2373
        %v2381 = vadd.f32 %v2380, %v2374
        %v2382 = vadd.f32 %v2381, %v2375
        %v2383 = vrot.slane %v2382, 4
        %v2384 = vadd.f32 %v2382, %v2383
        %v2385 = vrot.slane %v2384, 2
        %v2386 = vadd.f32 %v2384, %v2385
        %v2387 = vrot.slane %v2386, 1
        %v2388 = vadd.f32 %v2386, %v2387
        %2389 = vst [vmem:[%s300] sm:$0x1] %v2388
        %v2390 = vmul.f32 %v2368, %v2368
        %v2391 = vmul.f32 %v2369, %v2369
        %v2392 = vmul.f32 %v2370, %v2370
        %v2393 = vmul.f32 %v2371, %v2371
        %v2394 = vmul.f32 %v2372, %v2372
        %v2395 = vmul.f32 %v2373, %v2373
        %v2396 = vmul.f32 %v2374, %v2374
        %v2397 = vmul.f32 %v2375, %v2375
        %v2398 = vadd.f32 %v2390, %v2391
        %v2399 = vadd.f32 %v2398, %v2392
        %v2400 = vadd.f32 %v2399, %v2393
        %v2401 = vadd.f32 %v2400, %v2394
        %v2402 = vadd.f32 %v2401, %v2395
        %v2403 = vadd.f32 %v2402, %v2396
        %v2404 = vadd.f32 %v2403, %v2397
        %v2405 = vrot.slane %v2404, 4
        %v2406 = vadd.f32 %v2404, %v2405
        %v2407 = vrot.slane %v2406, 2
        %v2408 = vadd.f32 %v2406, %v2407
        %v2409 = vrot.slane %v2408, 1
        %v2410 = vadd.f32 %v2408, %v2409
        %2411 = vst [vmem:[%s300 + $0x1] sm:$0x1] %v2410
        %s2412 = sand.u32 %s157, 1
        %s2413 = scalar_lea.sflag [#allocation4], %s2412
        %s2414 = sand.u32 %s157, 1
        %s2415 = smul.addr %s2414, 32
        %s2416 = scalar_lea.vmem [#allocation3], %s2415
        %s2417 = sand.u32 %s183, 1
        %s2418 = scalar_lea.sflag [#allocation6], %s2417
        %s2419 = sand.u32 %s183, 1
        %s2420 = smul.addr %s2419, 2
        %s2421 = scalar_lea.vmem [#allocation5], %s2420
        // Predicated region
        $region41: #{tpu_custom_call.1} parent=39 // pred_check
          %p2422 = pneg %p167
        $region42: #{tpu_custom_call.1} parent=39 // pred_check_branch
          %2424 = sbr.rel (%p2422) target = $region44
        $region43: #{tpu_custom_call.1} parent=39 // pred_region
          %s2426 = ssub.s32 512, 512
          %2427 = vsyncadd %s2413, %s2426
          %s2428 = smul.addr %s24, 8
          %s2429 = smul.addr %s2428, 64
          %s2430 = scalar_lea.hbm %s5, %s2429
          %s2431 = sshll.u32 %s2416, 4
          %s2432 = int_to_ptr.vmem [resolvable:$true] %s2431
          %2437 = dma.vmem_to_hbm [thread:$0]  %s2432, 512, %s2430, %s2413, 64, 64, 4
        $region44: #{tpu_custom_call.1} parent=39 // pred_fallthru
          _
        // Predicated region
        $region45: #{tpu_custom_call.1} parent=39 // pred_check
          %p2438 = pneg %p193
        $region46: #{tpu_custom_call.1} parent=39 // pred_check_branch
          %2440 = sbr.rel (%p2438) target = $region48
        $region47: #{tpu_custom_call.1} parent=39 // pred_region
          %s2442 = ssub.s32 32, 32
          %2443 = vsyncadd %s2418, %s2442
          %s2444 = smul.addr %s24, 32
          %s2445 = scalar_lea.hbm %s6, %s2444
          %s2447 = sshll.u32 %s2421, 4
          %s2448 = int_to_ptr.vmem [resolvable:$true] %s2447
          %2450 = dma.vmem_to_hbm [thread:$0]  %s2448, 32, %s2445, %s2418
        $region48: #{tpu_custom_call.1} parent=39 // pred_fallthru
          _
      $region40: #{tpu_custom_call.1} parent=5 // pred_fallthru
        _
      %p2451 = scmp.le.s32.totalorder 2, %s19
      // Predicated region
      $region49: #{tpu_custom_call.1} parent=5 // pred_check
        %p2452 = pneg %p2451
      $region50: #{tpu_custom_call.1} parent=5 // pred_check_branch
        %2454 = sbr.rel (%p2452) target = $region52
      $region51: #{tpu_custom_call.1} parent=5 // pred_region
        %s2455 = ssub.s32 %s19, 2
        // Predicated region
        $region53: #{tpu_custom_call.1} parent=51 // pred_check
          %p2456 = pneg %p173
        $region54: #{tpu_custom_call.1} parent=51 // pred_check_branch
          %2458 = sbr.rel (%p2456) target = $region56
        $region55: #{tpu_custom_call.1} parent=51 // pred_region
          %s2459 = sand.u32 %s158, 1
          %s2460 = scalar_lea.sflag [#allocation4], %s2459
          %s2461 = sand.u32 %s158, 1
          %s2462 = smul.addr %s2461, 32
          %s2463 = scalar_lea.vmem [#allocation3], %s2462
          %2464 = dma.done %s2460, 512
        $region56: #{tpu_custom_call.1} parent=51 // pred_fallthru
          _
        // Predicated region
        $region57: #{tpu_custom_call.1} parent=51 // pred_check
          %p2465 = pneg %p199
        $region58: #{tpu_custom_call.1} parent=51 // pred_check_branch
          %2467 = sbr.rel (%p2465) target = $region60
        $region59: #{tpu_custom_call.1} parent=51 // pred_region
          %s2468 = sand.u32 %s184, 1
          %s2469 = scalar_lea.sflag [#allocation6], %s2468
          %s2470 = sand.u32 %s184, 1
          %s2471 = smul.addr %s2470, 2
          %s2472 = scalar_lea.vmem [#allocation5], %s2471
          %2473 = dma.done %s2469, 32
        $region60: #{tpu_custom_call.1} parent=51 // pred_fallthru
          _
      $region52: #{tpu_custom_call.1} parent=5 // pred_fallthru
        _
    $region6: #{tpu_custom_call.1} parent=1 // loop_footer
      %s23 = sadd.s32 1, %s19
    $region7: #{tpu_custom_call.1} parent=1 // loop_footer_branch
      %18 = sbr.rel target = $region3
    $region8: #{tpu_custom_call.1} parent=1 // loop_exit
      _
    %2474 = vsyncpa [#allocation4], 1
    %s2475 = scalar_lea.sflag [#allocation4], 1
    %2476 = vsyncpa %s2475, 1
    %2477 = vsyncpa [#allocation6], 1
    %s2478 = scalar_lea.sflag [#allocation6], 1
    %2479 = vsyncpa %s2478, 1

</llo_original>
